<compile_context>
chip_gen: v7x
topology: tpu7x:2x2x1
jax: 0.10.0
libtpu: 0.0.40
codegen_flags: <defaults>
</compile_context>

<pallas_src>
import jax
import jax.numpy as jnp
from jax.experimental import pallas as pl
from jax.experimental.pallas import tpu as pltpu


def make_encoder_kernel(B, T, E, H):
    H2, H3 = 2 * H, 3 * H
    B2 = 2 * B

    def kernel(emb_ref, wih_ref, bih_ref, whh_ref, bhn_ref, wred_ref, bred_ref,
               out_ref, hid_ref):
        # ---- hoisted input projection for BOTH directions:
        #      one (T*B, E) x (E, 6H) MXU matmul, result kept in vregs ----
        emb2d = emb_ref[...].reshape(T * B, E)
        gi = jnp.dot(emb2d, wih_ref[...],
                     preferred_element_type=jnp.float32) + bih_ref[...]   # (T*B, 6H)
        gi = gi.reshape(T, B, 2 * H3)                                      # (T, B, 6H)

        whh = whh_ref[...]        # (H, 6H)  = [whh_f^T | whh_b^T]
        bhn = bhn_ref[...]        # (2B, H)  b_hn broadcast per direction

        # carry: fwd state in rows [:B], bwd state in rows [B:]
        h_st = jnp.zeros((B2, H), jnp.float32)
        h_hist = []

        # ---- fused fwd/bwd recurrence, fully unrolled with static indices ----
        for s in range(T):
            t_b = T - 1 - s
            # time-aligned input gates for this step (independent of the carry)
            gi_s = jnp.concatenate([gi[s, :, :H3], gi[t_b, :, H3:]], axis=0)  # (2B, 3H)

            # single recurrent matmul for both directions (sublane-stacked carry)
            gh_all = jnp.dot(h_st, whh,
                             preferred_element_type=jnp.float32)              # (2B, 6H)
            gh = jnp.concatenate([gh_all[:B, :H3], gh_all[B:, H3:]], axis=0)  # (2B, 3H)

            # PyTorch GRU gate math (r/z bhh already folded into gi)
            r = jax.nn.sigmoid(gi_s[:, :H] + gh[:, :H])
            z = jax.nn.sigmoid(gi_s[:, H:H2] + gh[:, H:H2])
            n = jnp.tanh(gi_s[:, H2:] + r * (gh[:, H2:] + bhn))
            h_st = (1.0 - z) * n + z * h_st
            h_hist.append(h_st)

        # ---- epilogue: one bulk store of the (T, B, 2H) output ----
        out_f = jnp.stack([h[:B] for h in h_hist], axis=0)             # (T, B, H)
        out_b = jnp.stack([h[B:] for h in reversed(h_hist)], axis=0)   # (T, B, H)
        out_ref[...] = jnp.concatenate([out_f, out_b], axis=-1)        # (T, B, 2H)

        # hidden = Linear(cat(h_fwd_final, h_bwd_final)).unsqueeze(0)
        h_last = h_hist[-1]
        hid_cat = jnp.concatenate([h_last[:B], h_last[B:]], axis=-1)   # (B, 2H)
        hid = jnp.dot(hid_cat, wred_ref[...],
                      preferred_element_type=jnp.float32) + bred_ref[...]
        hid_ref[...] = hid.reshape(1, B, H)

    return kernel


def encoder_forward(src, params):
    emb_table = params["embedding"]
    B, T = src.shape
    E = emb_table.shape[1]
    H = params["whh_f"].shape[1]
    H2 = 2 * H

    # glue: embedding lookup (gather) done in plain JAX
    # TODO(synk): for large vocab/seq, fold the gather into the kernel via
    # PrefetchScalarGridSpec + pl.Element row-gather instead of materializing.
    embedded = jnp.take(emb_table, src, axis=0).astype(jnp.float32)   # (B, T, E)
    emb_tm = jnp.transpose(embedded, (1, 0, 2))                       # (T, B, E) time-major

    # ---- trace-time weight packing: pre-transposed, direction-fused ----
    wih_cat = jnp.concatenate([params["wih_f"].T, params["wih_b"].T], axis=1)   # (E, 6H)

    def fold_bias(bih, bhh):
        # fold b_hr, b_hz into bih; b_hn must stay inside r*(.)
        return jnp.concatenate([bih[:H2] + bhh[:H2], bih[H2:]])

    bih_cat = jnp.concatenate([fold_bias(params["bih_f"], params["bhh_f"]),
                               fold_bias(params["bih_b"], params["bhh_b"])]
                              ).reshape(1, 6 * H)
    whh_cat = jnp.concatenate([params["whh_f"].T, params["whh_b"].T], axis=1)   # (H, 6H)
    bhn_st = jnp.concatenate([jnp.broadcast_to(params["bhh_f"][H2:], (B, H)),
                              jnp.broadcast_to(params["bhh_b"][H2:], (B, H))],
                             axis=0)                                            # (2B, H)
    wred_t = params["wred"].T                                                   # (2H, H)
    bred = params["bred"].reshape(1, H)

    kernel = make_encoder_kernel(B, T, E, H)
    vmem = pl.BlockSpec(memory_space=pltpu.MemorySpace.VMEM)
    args = (emb_tm, wih_cat, bih_cat, whh_cat, bhn_st, wred_t, bred)

    out_tm, hidden = pl.pallas_call(
        kernel,
        out_shape=(jax.ShapeDtypeStruct((T, B, 2 * H), jnp.float32),
                   jax.ShapeDtypeStruct((1, B, H), jnp.float32)),
        in_specs=[vmem] * len(args),
        out_specs=(vmem, vmem),
    )(*args)

    outputs = jnp.transpose(out_tm, (1, 0, 2))   # (B, T, 2H), matches batch_first=True
    return outputs, hidden


def reference_forward(src, params):
    """Pure-JAX reference mirroring the PyTorch module semantics."""
    emb = jnp.take(params["embedding"], src, axis=0).astype(jnp.float32)
    B, T, _ = emb.shape
    H = params["whh_f"].shape[1]

    def cell(x_t, h, wih, whh, bih, bhh):
        gi = x_t @ wih.T + bih
        gh = h @ whh.T + bhh
        r = jax.nn.sigmoid(gi[:, :H] + gh[:, :H])
        z = jax.nn.sigmoid(gi[:, H:2 * H] + gh[:, H:2 * H])
        n = jnp.tanh(gi[:, 2 * H:] + r * gh[:, 2 * H:])
        return (1.0 - z) * n + z * h

    h = jnp.zeros((B, H), jnp.float32)
    outs_f = []
    for t in range(T):
        h = cell(emb[:, t], h, params["wih_f"], params["whh_f"],
                 params["bih_f"], params["bhh_f"])
        outs_f.append(h)
    h_f = h

    h = jnp.zeros((B, H), jnp.float32)
    outs_b = [None] * T
    for t in range(T - 1, -1, -1):
        h = cell(emb[:, t], h, params["wih_b"], params["whh_b"],
                 params["bih_b"], params["bhh_b"])
        outs_b[t] = h
    h_b = h

    outputs = jnp.concatenate([jnp.stack(outs_f, 1), jnp.stack(outs_b, 1)], axis=-1)
    hidden = (jnp.concatenate([h_f, h_b], -1) @ params["wred"].T + params["bred"])[None]
    return outputs, hidden


if __name__ == "__main__":
    V, E, H = 50, 16, 32     # vocab, embedding_dim, hidden_size
    B, T = 2, 8              # batch, seq

    key = jax.random.PRNGKey(0)
    ks = jax.random.split(key, 12)

    def u(k, shape):
        return jax.random.uniform(k, shape, jnp.float32, -0.1, 0.1)

    params = {
        "embedding": u(ks[0], (V, E)),
        # forward direction GRU weights (torch layout: (3H, E)/(3H, H)/(3H,))
        "wih_f": u(ks[1], (3 * H, E)), "whh_f": u(ks[2], (3 * H, H)),
        "bih_f": u(ks[3], (3 * H,)),   "bhh_f": u(ks[4], (3 * H,)),
        # backward direction
        "wih_b": u(ks[5], (3 * H, E)), "whh_b": u(ks[6], (3 * H, H)),
        "bih_b": u(ks[7], (3 * H,)),   "bhh_b": u(ks[8], (3 * H,)),
        # reduce_hidden: Linear(2H -> H)
        "wred": u(ks[9], (H, 2 * H)),  "bred": u(ks[10], (H,)),
    }
    src = jax.random.randint(ks[11], (B, T), 0, V, dtype=jnp.int32)

    outputs, hidden = jax.jit(encoder_forward)(src, params)
    jax.block_until_ready((outputs, hidden))

    ref_out, ref_hid = reference_forward(src, params)
    assert outputs.shape == (B, T, 2 * H) and hidden.shape == (1, B, H)
    assert jnp.allclose(outputs, ref_out, atol=1e-4), "outputs mismatch"
    assert jnp.allclose(hidden, ref_hid, atol=1e-4), "hidden mismatch"

    print("KERNEL_OK")
</pallas_src>

<mosaic_0001>
module attributes {stable_mosaic.version = 11 : i64} {
  func.func @kernel(%arg0: memref<8x2x16xf32, #tpu.memory_space<vmem>>, %arg1: memref<16x192xf32, #tpu.memory_space<vmem>>, %arg2: memref<1x192xf32, #tpu.memory_space<vmem>>, %arg3: memref<32x192xf32, #tpu.memory_space<vmem>>, %arg4: memref<4x32xf32, #tpu.memory_space<vmem>>, %arg5: memref<64x32xf32, #tpu.memory_space<vmem>>, %arg6: memref<1x32xf32, #tpu.memory_space<vmem>>, %arg7: memref<8x2x64xf32, #tpu.memory_space<vmem>>, %arg8: memref<1x2x32xf32, #tpu.memory_space<vmem>>) attributes {dimension_semantics = [], scalar_prefetch = 0 : i64, scratch_operands = 0 : i64, tpu.core_type = #tpu.core_type<tc>} {
    %c0 = arith.constant 0 : index
    %c0_0 = arith.constant 0 : index
    %c0_1 = arith.constant 0 : index
    %0 = vector.load %arg0[%c0, %c0_0, %c0_1] : memref<8x2x16xf32, #tpu.memory_space<vmem>>, vector<8x2x16xf32>
    %1 = vector.shape_cast %0 : vector<8x2x16xf32> to vector<16x16xf32>
    %c0_2 = arith.constant 0 : index
    %c0_3 = arith.constant 0 : index
    %2 = vector.load %arg1[%c0_2, %c0_3] : memref<16x192xf32, #tpu.memory_space<vmem>>, vector<16x192xf32>
    %cst = arith.constant dense<0.000000e+00> : vector<16x192xf32>
    %3 = tpu.matmul %1, %2, %cst {dimension_numbers = #tpu.dot_dimension_numbers<[1], [0], [0], [1], [0, 0, 1, 1], [], []>} : vector<16x16xf32>, vector<16x192xf32>, vector<16x192xf32> -> vector<16x192xf32>
    %c0_4 = arith.constant 0 : index
    %c0_5 = arith.constant 0 : index
    %4 = vector.load %arg2[%c0_4, %c0_5] : memref<1x192xf32, #tpu.memory_space<vmem>>, vector<1x192xf32>
    %5 = vector.broadcast %4 : vector<1x192xf32> to vector<16x192xf32>
    %6 = arith.addf %3, %5 : vector<16x192xf32>
    %7 = vector.shape_cast %6 : vector<16x192xf32> to vector<8x2x192xf32>
    %c0_6 = arith.constant 0 : index
    %c0_7 = arith.constant 0 : index
    %8 = vector.load %arg3[%c0_6, %c0_7] : memref<32x192xf32, #tpu.memory_space<vmem>>, vector<32x192xf32>
    %c0_8 = arith.constant 0 : index
    %c0_9 = arith.constant 0 : index
    %9 = vector.load %arg4[%c0_8, %c0_9] : memref<4x32xf32, #tpu.memory_space<vmem>>, vector<4x32xf32>
    %cst_10 = arith.constant 0.000000e+00 : f32
    %10 = vector.broadcast %cst_10 : f32 to vector<4x32xf32>
    %11 = vector.extract_strided_slice %7 {offsets = [0, 0, 0], sizes = [1, 2, 96], strides = [1, 1, 1]} : vector<8x2x192xf32> to vector<1x2x96xf32>
    %12 = vector.shape_cast %11 : vector<1x2x96xf32> to vector<2x96xf32>
    %13 = vector.extract_strided_slice %7 {offsets = [7, 0, 96], sizes = [1, 2, 96], strides = [1, 1, 1]} : vector<8x2x192xf32> to vector<1x2x96xf32>
    %14 = vector.shape_cast %13 : vector<1x2x96xf32> to vector<2x96xf32>
    %15 = tpu.concatenate %12, %14 in 0 : vector<2x96xf32>, vector<2x96xf32> -> vector<4x96xf32>
    %cst_11 = arith.constant dense<0.000000e+00> : vector<4x192xf32>
    %16 = tpu.matmul %10, %8, %cst_11 {dimension_numbers = #tpu.dot_dimension_numbers<[1], [0], [0], [1], [0, 0, 1, 1], [], []>} : vector<4x32xf32>, vector<32x192xf32>, vector<4x192xf32> -> vector<4x192xf32>
    %17 = vector.extract_strided_slice %16 {offsets = [0, 0], sizes = [2, 96], strides = [1, 1]} : vector<4x192xf32> to vector<2x96xf32>
    %18 = vector.extract_strided_slice %16 {offsets = [2, 96], sizes = [2, 96], strides = [1, 1]} : vector<4x192xf32> to vector<2x96xf32>
    %19 = tpu.concatenate %17, %18 in 0 : vector<2x96xf32>, vector<2x96xf32> -> vector<4x96xf32>
    %20 = vector.extract_strided_slice %15 {offsets = [0, 0], sizes = [4, 32], strides = [1, 1]} : vector<4x96xf32> to vector<4x32xf32>
    %21 = vector.extract_strided_slice %19 {offsets = [0, 0], sizes = [4, 32], strides = [1, 1]} : vector<4x96xf32> to vector<4x32xf32>
    %22 = arith.addf %20, %21 : vector<4x32xf32>
    %23 = arith.negf %22 : vector<4x32xf32>
    %24 = math.exp %23 : vector<4x32xf32>
    %cst_12 = arith.constant 1.000000e+00 : f32
    %25 = vector.broadcast %cst_12 : f32 to vector<4x32xf32>
    %26 = arith.addf %25, %24 : vector<4x32xf32>
    %27 = arith.divf %25, %26 : vector<4x32xf32>
    %28 = vector.extract_strided_slice %15 {offsets = [0, 32], sizes = [4, 32], strides = [1, 1]} : vector<4x96xf32> to vector<4x32xf32>
    %29 = vector.extract_strided_slice %19 {offsets = [0, 32], sizes = [4, 32], strides = [1, 1]} : vector<4x96xf32> to vector<4x32xf32>
    %30 = arith.addf %28, %29 : vector<4x32xf32>
    %31 = arith.negf %30 : vector<4x32xf32>
    %32 = math.exp %31 : vector<4x32xf32>
    %cst_13 = arith.constant 1.000000e+00 : f32
    %33 = vector.broadcast %cst_13 : f32 to vector<4x32xf32>
    %34 = arith.addf %33, %32 : vector<4x32xf32>
    %35 = arith.divf %33, %34 : vector<4x32xf32>
    %36 = vector.extract_strided_slice %15 {offsets = [0, 64], sizes = [4, 32], strides = [1, 1]} : vector<4x96xf32> to vector<4x32xf32>
    %37 = vector.extract_strided_slice %19 {offsets = [0, 64], sizes = [4, 32], strides = [1, 1]} : vector<4x96xf32> to vector<4x32xf32>
    %38 = arith.addf %37, %9 : vector<4x32xf32>
    %39 = arith.mulf %27, %38 : vector<4x32xf32>
    %40 = arith.addf %36, %39 : vector<4x32xf32>
    %41 = math.tanh %40 : vector<4x32xf32>
    %cst_14 = arith.constant 1.000000e+00 : f32
    %42 = vector.broadcast %cst_14 : f32 to vector<4x32xf32>
    %43 = arith.subf %42, %35 : vector<4x32xf32>
    %44 = arith.mulf %43, %41 : vector<4x32xf32>
    %45 = arith.mulf %35, %10 : vector<4x32xf32>
    %46 = arith.addf %44, %45 : vector<4x32xf32>
    %47 = vector.extract_strided_slice %7 {offsets = [1, 0, 0], sizes = [1, 2, 96], strides = [1, 1, 1]} : vector<8x2x192xf32> to vector<1x2x96xf32>
    %48 = vector.shape_cast %47 : vector<1x2x96xf32> to vector<2x96xf32>
    %49 = vector.extract_strided_slice %7 {offsets = [6, 0, 96], sizes = [1, 2, 96], strides = [1, 1, 1]} : vector<8x2x192xf32> to vector<1x2x96xf32>
    %50 = vector.shape_cast %49 : vector<1x2x96xf32> to vector<2x96xf32>
    %51 = tpu.concatenate %48, %50 in 0 : vector<2x96xf32>, vector<2x96xf32> -> vector<4x96xf32>
    %cst_15 = arith.constant dense<0.000000e+00> : vector<4x192xf32>
    %52 = tpu.matmul %46, %8, %cst_15 {dimension_numbers = #tpu.dot_dimension_numbers<[1], [0], [0], [1], [0, 0, 1, 1], [], []>} : vector<4x32xf32>, vector<32x192xf32>, vector<4x192xf32> -> vector<4x192xf32>
    %53 = vector.extract_strided_slice %52 {offsets = [0, 0], sizes = [2, 96], strides = [1, 1]} : vector<4x192xf32> to vector<2x96xf32>
    %54 = vector.extract_strided_slice %52 {offsets = [2, 96], sizes = [2, 96], strides = [1, 1]} : vector<4x192xf32> to vector<2x96xf32>
    %55 = tpu.concatenate %53, %54 in 0 : vector<2x96xf32>, vector<2x96xf32> -> vector<4x96xf32>
    %56 = vector.extract_strided_slice %51 {offsets = [0, 0], sizes = [4, 32], strides = [1, 1]} : vector<4x96xf32> to vector<4x32xf32>
    %57 = vector.extract_strided_slice %55 {offsets = [0, 0], sizes = [4, 32], strides = [1, 1]} : vector<4x96xf32> to vector<4x32xf32>
    %58 = arith.addf %56, %57 : vector<4x32xf32>
    %59 = arith.negf %58 : vector<4x32xf32>
    %60 = math.exp %59 : vector<4x32xf32>
    %cst_16 = arith.constant 1.000000e+00 : f32
    %61 = vector.broadcast %cst_16 : f32 to vector<4x32xf32>
    %62 = arith.addf %61, %60 : vector<4x32xf32>
    %63 = arith.divf %61, %62 : vector<4x32xf32>
    %64 = vector.extract_strided_slice %51 {offsets = [0, 32], sizes = [4, 32], strides = [1, 1]} : vector<4x96xf32> to vector<4x32xf32>
    %65 = vector.extract_strided_slice %55 {offsets = [0, 32], sizes = [4, 32], strides = [1, 1]} : vector<4x96xf32> to vector<4x32xf32>
    %66 = arith.addf %64, %65 : vector<4x32xf32>
    %67 = arith.negf %66 : vector<4x32xf32>
    %68 = math.exp %67 : vector<4x32xf32>
    %cst_17 = arith.constant 1.000000e+00 : f32
    %69 = vector.broadcast %cst_17 : f32 to vector<4x32xf32>
    %70 = arith.addf %69, %68 : vector<4x32xf32>
    %71 = arith.divf %69, %70 : vector<4x32xf32>
    %72 = vector.extract_strided_slice %51 {offsets = [0, 64], sizes = [4, 32], strides = [1, 1]} : vector<4x96xf32> to vector<4x32xf32>
    %73 = vector.extract_strided_slice %55 {offsets = [0, 64], sizes = [4, 32], strides = [1, 1]} : vector<4x96xf32> to vector<4x32xf32>
    %74 = arith.addf %73, %9 : vector<4x32xf32>
    %75 = arith.mulf %63, %74 : vector<4x32xf32>
    %76 = arith.addf %72, %75 : vector<4x32xf32>
    %77 = math.tanh %76 : vector<4x32xf32>
    %cst_18 = arith.constant 1.000000e+00 : f32
    %78 = vector.broadcast %cst_18 : f32 to vector<4x32xf32>
    %79 = arith.subf %78, %71 : vector<4x32xf32>
    %80 = arith.mulf %79, %77 : vector<4x32xf32>
    %81 = arith.mulf %71, %46 : vector<4x32xf32>
    %82 = arith.addf %80, %81 : vector<4x32xf32>
    %83 = vector.extract_strided_slice %7 {offsets = [2, 0, 0], sizes = [1, 2, 96], strides = [1, 1, 1]} : vector<8x2x192xf32> to vector<1x2x96xf32>
    %84 = vector.shape_cast %83 : vector<1x2x96xf32> to vector<2x96xf32>
    %85 = vector.extract_strided_slice %7 {offsets = [5, 0, 96], sizes = [1, 2, 96], strides = [1, 1, 1]} : vector<8x2x192xf32> to vector<1x2x96xf32>
    %86 = vector.shape_cast %85 : vector<1x2x96xf32> to vector<2x96xf32>
    %87 = tpu.concatenate %84, %86 in 0 : vector<2x96xf32>, vector<2x96xf32> -> vector<4x96xf32>
    %cst_19 = arith.constant dense<0.000000e+00> : vector<4x192xf32>
    %88 = tpu.matmul %82, %8, %cst_19 {dimension_numbers = #tpu.dot_dimension_numbers<[1], [0], [0], [1], [0, 0, 1, 1], [], []>} : vector<4x32xf32>, vector<32x192xf32>, vector<4x192xf32> -> vector<4x192xf32>
    %89 = vector.extract_strided_slice %88 {offsets = [0, 0], sizes = [2, 96], strides = [1, 1]} : vector<4x192xf32> to vector<2x96xf32>
    %90 = vector.extract_strided_slice %88 {offsets = [2, 96], sizes = [2, 96], strides = [1, 1]} : vector<4x192xf32> to vector<2x96xf32>
    %91 = tpu.concatenate %89, %90 in 0 : vector<2x96xf32>, vector<2x96xf32> -> vector<4x96xf32>
    %92 = vector.extract_strided_slice %87 {offsets = [0, 0], sizes = [4, 32], strides = [1, 1]} : vector<4x96xf32> to vector<4x32xf32>
    %93 = vector.extract_strided_slice %91 {offsets = [0, 0], sizes = [4, 32], strides = [1, 1]} : vector<4x96xf32> to vector<4x32xf32>
    %94 = arith.addf %92, %93 : vector<4x32xf32>
    %95 = arith.negf %94 : vector<4x32xf32>
    %96 = math.exp %95 : vector<4x32xf32>
    %cst_20 = arith.constant 1.000000e+00 : f32
    %97 = vector.broadcast %cst_20 : f32 to vector<4x32xf32>
    %98 = arith.addf %97, %96 : vector<4x32xf32>
    %99 = arith.divf %97, %98 : vector<4x32xf32>
    %100 = vector.extract_strided_slice %87 {offsets = [0, 32], sizes = [4, 32], strides = [1, 1]} : vector<4x96xf32> to vector<4x32xf32>
    %101 = vector.extract_strided_slice %91 {offsets = [0, 32], sizes = [4, 32], strides = [1, 1]} : vector<4x96xf32> to vector<4x32xf32>
    %102 = arith.addf %100, %101 : vector<4x32xf32>
    %103 = arith.negf %102 : vector<4x32xf32>
    %104 = math.exp %103 : vector<4x32xf32>
    %cst_21 = arith.constant 1.000000e+00 : f32
    %105 = vector.broadcast %cst_21 : f32 to vector<4x32xf32>
    %106 = arith.addf %105, %104 : vector<4x32xf32>
    %107 = arith.divf %105, %106 : vector<4x32xf32>
    %108 = vector.extract_strided_slice %87 {offsets = [0, 64], sizes = [4, 32], strides = [1, 1]} : vector<4x96xf32> to vector<4x32xf32>
    %109 = vector.extract_strided_slice %91 {offsets = [0, 64], sizes = [4, 32], strides = [1, 1]} : vector<4x96xf32> to vector<4x32xf32>
    %110 = arith.addf %109, %9 : vector<4x32xf32>
    %111 = arith.mulf %99, %110 : vector<4x32xf32>
    %112 = arith.addf %108, %111 : vector<4x32xf32>
    %113 = math.tanh %112 : vector<4x32xf32>
    %cst_22 = arith.constant 1.000000e+00 : f32
    %114 = vector.broadcast %cst_22 : f32 to vector<4x32xf32>
    %115 = arith.subf %114, %107 : vector<4x32xf32>
    %116 = arith.mulf %115, %113 : vector<4x32xf32>
    %117 = arith.mulf %107, %82 : vector<4x32xf32>
    %118 = arith.addf %116, %117 : vector<4x32xf32>
    %119 = vector.extract_strided_slice %7 {offsets = [3, 0, 0], sizes = [1, 2, 96], strides = [1, 1, 1]} : vector<8x2x192xf32> to vector<1x2x96xf32>
    %120 = vector.shape_cast %119 : vector<1x2x96xf32> to vector<2x96xf32>
    %121 = vector.extract_strided_slice %7 {offsets = [4, 0, 96], sizes = [1, 2, 96], strides = [1, 1, 1]} : vector<8x2x192xf32> to vector<1x2x96xf32>
    %122 = vector.shape_cast %121 : vector<1x2x96xf32> to vector<2x96xf32>
    %123 = tpu.concatenate %120, %122 in 0 : vector<2x96xf32>, vector<2x96xf32> -> vector<4x96xf32>
    %cst_23 = arith.constant dense<0.000000e+00> : vector<4x192xf32>
    %124 = tpu.matmul %118, %8, %cst_23 {dimension_numbers = #tpu.dot_dimension_numbers<[1], [0], [0], [1], [0, 0, 1, 1], [], []>} : vector<4x32xf32>, vector<32x192xf32>, vector<4x192xf32> -> vector<4x192xf32>
    %125 = vector.extract_strided_slice %124 {offsets = [0, 0], sizes = [2, 96], strides = [1, 1]} : vector<4x192xf32> to vector<2x96xf32>
    %126 = vector.extract_strided_slice %124 {offsets = [2, 96], sizes = [2, 96], strides = [1, 1]} : vector<4x192xf32> to vector<2x96xf32>
    %127 = tpu.concatenate %125, %126 in 0 : vector<2x96xf32>, vector<2x96xf32> -> vector<4x96xf32>
    %128 = vector.extract_strided_slice %123 {offsets = [0, 0], sizes = [4, 32], strides = [1, 1]} : vector<4x96xf32> to vector<4x32xf32>
    %129 = vector.extract_strided_slice %127 {offsets = [0, 0], sizes = [4, 32], strides = [1, 1]} : vector<4x96xf32> to vector<4x32xf32>
    %130 = arith.addf %128, %129 : vector<4x32xf32>
    %131 = arith.negf %130 : vector<4x32xf32>
    %132 = math.exp %131 : vector<4x32xf32>
    %cst_24 = arith.constant 1.000000e+00 : f32
    %133 = vector.broadcast %cst_24 : f32 to vector<4x32xf32>
    %134 = arith.addf %133, %132 : vector<4x32xf32>
    %135 = arith.divf %133, %134 : vector<4x32xf32>
    %136 = vector.extract_strided_slice %123 {offsets = [0, 32], sizes = [4, 32], strides = [1, 1]} : vector<4x96xf32> to vector<4x32xf32>
    %137 = vector.extract_strided_slice %127 {offsets = [0, 32], sizes = [4, 32], strides = [1, 1]} : vector<4x96xf32> to vector<4x32xf32>
    %138 = arith.addf %136, %137 : vector<4x32xf32>
    %139 = arith.negf %138 : vector<4x32xf32>
    %140 = math.exp %139 : vector<4x32xf32>
    %cst_25 = arith.constant 1.000000e+00 : f32
    %141 = vector.broadcast %cst_25 : f32 to vector<4x32xf32>
    %142 = arith.addf %141, %140 : vector<4x32xf32>
    %143 = arith.divf %141, %142 : vector<4x32xf32>
    %144 = vector.extract_strided_slice %123 {offsets = [0, 64], sizes = [4, 32], strides = [1, 1]} : vector<4x96xf32> to vector<4x32xf32>
    %145 = vector.extract_strided_slice %127 {offsets = [0, 64], sizes = [4, 32], strides = [1, 1]} : vector<4x96xf32> to vector<4x32xf32>
    %146 = arith.addf %145, %9 : vector<4x32xf32>
    %147 = arith.mulf %135, %146 : vector<4x32xf32>
    %148 = arith.addf %144, %147 : vector<4x32xf32>
    %149 = math.tanh %148 : vector<4x32xf32>
    %cst_26 = arith.constant 1.000000e+00 : f32
    %150 = vector.broadcast %cst_26 : f32 to vector<4x32xf32>
    %151 = arith.subf %150, %143 : vector<4x32xf32>
    %152 = arith.mulf %151, %149 : vector<4x32xf32>
    %153 = arith.mulf %143, %118 : vector<4x32xf32>
    %154 = arith.addf %152, %153 : vector<4x32xf32>
    %155 = vector.extract_strided_slice %7 {offsets = [4, 0, 0], sizes = [1, 2, 96], strides = [1, 1, 1]} : vector<8x2x192xf32> to vector<1x2x96xf32>
    %156 = vector.shape_cast %155 : vector<1x2x96xf32> to vector<2x96xf32>
    %157 = vector.extract_strided_slice %7 {offsets = [3, 0, 96], sizes = [1, 2, 96], strides = [1, 1, 1]} : vector<8x2x192xf32> to vector<1x2x96xf32>
    %158 = vector.shape_cast %157 : vector<1x2x96xf32> to vector<2x96xf32>
    %159 = tpu.concatenate %156, %158 in 0 : vector<2x96xf32>, vector<2x96xf32> -> vector<4x96xf32>
    %cst_27 = arith.constant dense<0.000000e+00> : vector<4x192xf32>
    %160 = tpu.matmul %154, %8, %cst_27 {dimension_numbers = #tpu.dot_dimension_numbers<[1], [0], [0], [1], [0, 0, 1, 1], [], []>} : vector<4x32xf32>, vector<32x192xf32>, vector<4x192xf32> -> vector<4x192xf32>
    %161 = vector.extract_strided_slice %160 {offsets = [0, 0], sizes = [2, 96], strides = [1, 1]} : vector<4x192xf32> to vector<2x96xf32>
    %162 = vector.extract_strided_slice %160 {offsets = [2, 96], sizes = [2, 96], strides = [1, 1]} : vector<4x192xf32> to vector<2x96xf32>
    %163 = tpu.concatenate %161, %162 in 0 : vector<2x96xf32>, vector<2x96xf32> -> vector<4x96xf32>
    %164 = vector.extract_strided_slice %159 {offsets = [0, 0], sizes = [4, 32], strides = [1, 1]} : vector<4x96xf32> to vector<4x32xf32>
    %165 = vector.extract_strided_slice %163 {offsets = [0, 0], sizes = [4, 32], strides = [1, 1]} : vector<4x96xf32> to vector<4x32xf32>
    %166 = arith.addf %164, %165 : vector<4x32xf32>
    %167 = arith.negf %166 : vector<4x32xf32>
    %168 = math.exp %167 : vector<4x32xf32>
    %cst_28 = arith.constant 1.000000e+00 : f32
    %169 = vector.broadcast %cst_28 : f32 to vector<4x32xf32>
    %170 = arith.addf %169, %168 : vector<4x32xf32>
    %171 = arith.divf %169, %170 : vector<4x32xf32>
    %172 = vector.extract_strided_slice %159 {offsets = [0, 32], sizes = [4, 32], strides = [1, 1]} : vector<4x96xf32> to vector<4x32xf32>
    %173 = vector.extract_strided_slice %163 {offsets = [0, 32], sizes = [4, 32], strides = [1, 1]} : vector<4x96xf32> to vector<4x32xf32>
    %174 = arith.addf %172, %173 : vector<4x32xf32>
    %175 = arith.negf %174 : vector<4x32xf32>
    %176 = math.exp %175 : vector<4x32xf32>
    %cst_29 = arith.constant 1.000000e+00 : f32
    %177 = vector.broadcast %cst_29 : f32 to vector<4x32xf32>
    %178 = arith.addf %177, %176 : vector<4x32xf32>
    %179 = arith.divf %177, %178 : vector<4x32xf32>
    %180 = vector.extract_strided_slice %159 {offsets = [0, 64], sizes = [4, 32], strides = [1, 1]} : vector<4x96xf32> to vector<4x32xf32>
    %181 = vector.extract_strided_slice %163 {offsets = [0, 64], sizes = [4, 32], strides = [1, 1]} : vector<4x96xf32> to vector<4x32xf32>
    %182 = arith.addf %181, %9 : vector<4x32xf32>
    %183 = arith.mulf %171, %182 : vector<4x32xf32>
    %184 = arith.addf %180, %183 : vector<4x32xf32>
    %185 = math.tanh %184 : vector<4x32xf32>
    %cst_30 = arith.constant 1.000000e+00 : f32
    %186 = vector.broadcast %cst_30 : f32 to vector<4x32xf32>
    %187 = arith.subf %186, %179 : vector<4x32xf32>
    %188 = arith.mulf %187, %185 : vector<4x32xf32>
    %189 = arith.mulf %179, %154 : vector<4x32xf32>
    %190 = arith.addf %188, %189 : vector<4x32xf32>
    %191 = vector.extract_strided_slice %7 {offsets = [5, 0, 0], sizes = [1, 2, 96], strides = [1, 1, 1]} : vector<8x2x192xf32> to vector<1x2x96xf32>
    %192 = vector.shape_cast %191 : vector<1x2x96xf32> to vector<2x96xf32>
    %193 = vector.extract_strided_slice %7 {offsets = [2, 0, 96], sizes = [1, 2, 96], strides = [1, 1, 1]} : vector<8x2x192xf32> to vector<1x2x96xf32>
    %194 = vector.shape_cast %193 : vector<1x2x96xf32> to vector<2x96xf32>
    %195 = tpu.concatenate %192, %194 in 0 : vector<2x96xf32>, vector<2x96xf32> -> vector<4x96xf32>
    %cst_31 = arith.constant dense<0.000000e+00> : vector<4x192xf32>
    %196 = tpu.matmul %190, %8, %cst_31 {dimension_numbers = #tpu.dot_dimension_numbers<[1], [0], [0], [1], [0, 0, 1, 1], [], []>} : vector<4x32xf32>, vector<32x192xf32>, vector<4x192xf32> -> vector<4x192xf32>
    %197 = vector.extract_strided_slice %196 {offsets = [0, 0], sizes = [2, 96], strides = [1, 1]} : vector<4x192xf32> to vector<2x96xf32>
    %198 = vector.extract_strided_slice %196 {offsets = [2, 96], sizes = [2, 96], strides = [1, 1]} : vector<4x192xf32> to vector<2x96xf32>
    %199 = tpu.concatenate %197, %198 in 0 : vector<2x96xf32>, vector<2x96xf32> -> vector<4x96xf32>
    %200 = vector.extract_strided_slice %195 {offsets = [0, 0], sizes = [4, 32], strides = [1, 1]} : vector<4x96xf32> to vector<4x32xf32>
    %201 = vector.extract_strided_slice %199 {offsets = [0, 0], sizes = [4, 32], strides = [1, 1]} : vector<4x96xf32> to vector<4x32xf32>
    %202 = arith.addf %200, %201 : vector<4x32xf32>
    %203 = arith.negf %202 : vector<4x32xf32>
    %204 = math.exp %203 : vector<4x32xf32>
    %cst_32 = arith.constant 1.000000e+00 : f32
    %205 = vector.broadcast %cst_32 : f32 to vector<4x32xf32>
    %206 = arith.addf %205, %204 : vector<4x32xf32>
    %207 = arith.divf %205, %206 : vector<4x32xf32>
    %208 = vector.extract_strided_slice %195 {offsets = [0, 32], sizes = [4, 32], strides = [1, 1]} : vector<4x96xf32> to vector<4x32xf32>
    %209 = vector.extract_strided_slice %199 {offsets = [0, 32], sizes = [4, 32], strides = [1, 1]} : vector<4x96xf32> to vector<4x32xf32>
    %210 = arith.addf %208, %209 : vector<4x32xf32>
    %211 = arith.negf %210 : vector<4x32xf32>
    %212 = math.exp %211 : vector<4x32xf32>
    %cst_33 = arith.constant 1.000000e+00 : f32
    %213 = vector.broadcast %cst_33 : f32 to vector<4x32xf32>
    %214 = arith.addf %213, %212 : vector<4x32xf32>
    %215 = arith.divf %213, %214 : vector<4x32xf32>
    %216 = vector.extract_strided_slice %195 {offsets = [0, 64], sizes = [4, 32], strides = [1, 1]} : vector<4x96xf32> to vector<4x32xf32>
    %217 = vector.extract_strided_slice %199 {offsets = [0, 64], sizes = [4, 32], strides = [1, 1]} : vector<4x96xf32> to vector<4x32xf32>
    %218 = arith.addf %217, %9 : vector<4x32xf32>
    %219 = arith.mulf %207, %218 : vector<4x32xf32>
    %220 = arith.addf %216, %219 : vector<4x32xf32>
    %221 = math.tanh %220 : vector<4x32xf32>
    %cst_34 = arith.constant 1.000000e+00 : f32
    %222 = vector.broadcast %cst_34 : f32 to vector<4x32xf32>
    %223 = arith.subf %222, %215 : vector<4x32xf32>
    %224 = arith.mulf %223, %221 : vector<4x32xf32>
    %225 = arith.mulf %215, %190 : vector<4x32xf32>
    %226 = arith.addf %224, %225 : vector<4x32xf32>
    %227 = vector.extract_strided_slice %7 {offsets = [6, 0, 0], sizes = [1, 2, 96], strides = [1, 1, 1]} : vector<8x2x192xf32> to vector<1x2x96xf32>
    %228 = vector.shape_cast %227 : vector<1x2x96xf32> to vector<2x96xf32>
    %229 = vector.extract_strided_slice %7 {offsets = [1, 0, 96], sizes = [1, 2, 96], strides = [1, 1, 1]} : vector<8x2x192xf32> to vector<1x2x96xf32>
    %230 = vector.shape_cast %229 : vector<1x2x96xf32> to vector<2x96xf32>
    %231 = tpu.concatenate %228, %230 in 0 : vector<2x96xf32>, vector<2x96xf32> -> vector<4x96xf32>
    %cst_35 = arith.constant dense<0.000000e+00> : vector<4x192xf32>
    %232 = tpu.matmul %226, %8, %cst_35 {dimension_numbers = #tpu.dot_dimension_numbers<[1], [0], [0], [1], [0, 0, 1, 1], [], []>} : vector<4x32xf32>, vector<32x192xf32>, vector<4x192xf32> -> vector<4x192xf32>
    %233 = vector.extract_strided_slice %232 {offsets = [0, 0], sizes = [2, 96], strides = [1, 1]} : vector<4x192xf32> to vector<2x96xf32>
    %234 = vector.extract_strided_slice %232 {offsets = [2, 96], sizes = [2, 96], strides = [1, 1]} : vector<4x192xf32> to vector<2x96xf32>
    %235 = tpu.concatenate %233, %234 in 0 : vector<2x96xf32>, vector<2x96xf32> -> vector<4x96xf32>
    %236 = vector.extract_strided_slice %231 {offsets = [0, 0], sizes = [4, 32], strides = [1, 1]} : vector<4x96xf32> to vector<4x32xf32>
    %237 = vector.extract_strided_slice %235 {offsets = [0, 0], sizes = [4, 32], strides = [1, 1]} : vector<4x96xf32> to vector<4x32xf32>
    %238 = arith.addf %236, %237 : vector<4x32xf32>
    %239 = arith.negf %238 : vector<4x32xf32>
    %240 = math.exp %239 : vector<4x32xf32>
    %cst_36 = arith.constant 1.000000e+00 : f32
    %241 = vector.broadcast %cst_36 : f32 to vector<4x32xf32>
    %242 = arith.addf %241, %240 : vector<4x32xf32>
    %243 = arith.divf %241, %242 : vector<4x32xf32>
    %244 = vector.extract_strided_slice %231 {offsets = [0, 32], sizes = [4, 32], strides = [1, 1]} : vector<4x96xf32> to vector<4x32xf32>
    %245 = vector.extract_strided_slice %235 {offsets = [0, 32], sizes = [4, 32], strides = [1, 1]} : vector<4x96xf32> to vector<4x32xf32>
    %246 = arith.addf %244, %245 : vector<4x32xf32>
    %247 = arith.negf %246 : vector<4x32xf32>
    %248 = math.exp %247 : vector<4x32xf32>
    %cst_37 = arith.constant 1.000000e+00 : f32
    %249 = vector.broadcast %cst_37 : f32 to vector<4x32xf32>
    %250 = arith.addf %249, %248 : vector<4x32xf32>
    %251 = arith.divf %249, %250 : vector<4x32xf32>
    %252 = vector.extract_strided_slice %231 {offsets = [0, 64], sizes = [4, 32], strides = [1, 1]} : vector<4x96xf32> to vector<4x32xf32>
    %253 = vector.extract_strided_slice %235 {offsets = [0, 64], sizes = [4, 32], strides = [1, 1]} : vector<4x96xf32> to vector<4x32xf32>
    %254 = arith.addf %253, %9 : vector<4x32xf32>
    %255 = arith.mulf %243, %254 : vector<4x32xf32>
    %256 = arith.addf %252, %255 : vector<4x32xf32>
    %257 = math.tanh %256 : vector<4x32xf32>
    %cst_38 = arith.constant 1.000000e+00 : f32
    %258 = vector.broadcast %cst_38 : f32 to vector<4x32xf32>
    %259 = arith.subf %258, %251 : vector<4x32xf32>
    %260 = arith.mulf %259, %257 : vector<4x32xf32>
    %261 = arith.mulf %251, %226 : vector<4x32xf32>
    %262 = arith.addf %260, %261 : vector<4x32xf32>
    %263 = vector.extract_strided_slice %7 {offsets = [7, 0, 0], sizes = [1, 2, 96], strides = [1, 1, 1]} : vector<8x2x192xf32> to vector<1x2x96xf32>
    %264 = vector.shape_cast %263 : vector<1x2x96xf32> to vector<2x96xf32>
    %265 = vector.extract_strided_slice %7 {offsets = [0, 0, 96], sizes = [1, 2, 96], strides = [1, 1, 1]} : vector<8x2x192xf32> to vector<1x2x96xf32>
    %266 = vector.shape_cast %265 : vector<1x2x96xf32> to vector<2x96xf32>
    %267 = tpu.concatenate %264, %266 in 0 : vector<2x96xf32>, vector<2x96xf32> -> vector<4x96xf32>
    %cst_39 = arith.constant dense<0.000000e+00> : vector<4x192xf32>
    %268 = tpu.matmul %262, %8, %cst_39 {dimension_numbers = #tpu.dot_dimension_numbers<[1], [0], [0], [1], [0, 0, 1, 1], [], []>} : vector<4x32xf32>, vector<32x192xf32>, vector<4x192xf32> -> vector<4x192xf32>
    %269 = vector.extract_strided_slice %268 {offsets = [0, 0], sizes = [2, 96], strides = [1, 1]} : vector<4x192xf32> to vector<2x96xf32>
    %270 = vector.extract_strided_slice %268 {offsets = [2, 96], sizes = [2, 96], strides = [1, 1]} : vector<4x192xf32> to vector<2x96xf32>
    %271 = tpu.concatenate %269, %270 in 0 : vector<2x96xf32>, vector<2x96xf32> -> vector<4x96xf32>
    %272 = vector.extract_strided_slice %267 {offsets = [0, 0], sizes = [4, 32], strides = [1, 1]} : vector<4x96xf32> to vector<4x32xf32>
    %273 = vector.extract_strided_slice %271 {offsets = [0, 0], sizes = [4, 32], strides = [1, 1]} : vector<4x96xf32> to vector<4x32xf32>
    %274 = arith.addf %272, %273 : vector<4x32xf32>
    %275 = arith.negf %274 : vector<4x32xf32>
    %276 = math.exp %275 : vector<4x32xf32>
    %cst_40 = arith.constant 1.000000e+00 : f32
    %277 = vector.broadcast %cst_40 : f32 to vector<4x32xf32>
    %278 = arith.addf %277, %276 : vector<4x32xf32>
    %279 = arith.divf %277, %278 : vector<4x32xf32>
    %280 = vector.extract_strided_slice %267 {offsets = [0, 32], sizes = [4, 32], strides = [1, 1]} : vector<4x96xf32> to vector<4x32xf32>
    %281 = vector.extract_strided_slice %271 {offsets = [0, 32], sizes = [4, 32], strides = [1, 1]} : vector<4x96xf32> to vector<4x32xf32>
    %282 = arith.addf %280, %281 : vector<4x32xf32>
    %283 = arith.negf %282 : vector<4x32xf32>
    %284 = math.exp %283 : vector<4x32xf32>
    %cst_41 = arith.constant 1.000000e+00 : f32
    %285 = vector.broadcast %cst_41 : f32 to vector<4x32xf32>
    %286 = arith.addf %285, %284 : vector<4x32xf32>
    %287 = arith.divf %285, %286 : vector<4x32xf32>
    %288 = vector.extract_strided_slice %267 {offsets = [0, 64], sizes = [4, 32], strides = [1, 1]} : vector<4x96xf32> to vector<4x32xf32>
    %289 = vector.extract_strided_slice %271 {offsets = [0, 64], sizes = [4, 32], strides = [1, 1]} : vector<4x96xf32> to vector<4x32xf32>
    %290 = arith.addf %289, %9 : vector<4x32xf32>
    %291 = arith.mulf %279, %290 : vector<4x32xf32>
    %292 = arith.addf %288, %291 : vector<4x32xf32>
    %293 = math.tanh %292 : vector<4x32xf32>
    %cst_42 = arith.constant 1.000000e+00 : f32
    %294 = vector.broadcast %cst_42 : f32 to vector<4x32xf32>
    %295 = arith.subf %294, %287 : vector<4x32xf32>
    %296 = arith.mulf %295, %293 : vector<4x32xf32>
    %297 = arith.mulf %287, %262 : vector<4x32xf32>
    %298 = arith.addf %296, %297 : vector<4x32xf32>
    %299 = vector.extract_strided_slice %46 {offsets = [0, 0], sizes = [2, 32], strides = [1, 1]} : vector<4x32xf32> to vector<2x32xf32>
    %300 = vector.extract_strided_slice %82 {offsets = [0, 0], sizes = [2, 32], strides = [1, 1]} : vector<4x32xf32> to vector<2x32xf32>
    %301 = vector.extract_strided_slice %118 {offsets = [0, 0], sizes = [2, 32], strides = [1, 1]} : vector<4x32xf32> to vector<2x32xf32>
    %302 = vector.extract_strided_slice %154 {offsets = [0, 0], sizes = [2, 32], strides = [1, 1]} : vector<4x32xf32> to vector<2x32xf32>
    %303 = vector.extract_strided_slice %190 {offsets = [0, 0], sizes = [2, 32], strides = [1, 1]} : vector<4x32xf32> to vector<2x32xf32>
    %304 = vector.extract_strided_slice %226 {offsets = [0, 0], sizes = [2, 32], strides = [1, 1]} : vector<4x32xf32> to vector<2x32xf32>
    %305 = vector.extract_strided_slice %262 {offsets = [0, 0], sizes = [2, 32], strides = [1, 1]} : vector<4x32xf32> to vector<2x32xf32>
    %306 = vector.extract_strided_slice %298 {offsets = [0, 0], sizes = [2, 32], strides = [1, 1]} : vector<4x32xf32> to vector<2x32xf32>
    %307 = vector.shape_cast %299 : vector<2x32xf32> to vector<1x2x32xf32>
    %308 = vector.shape_cast %300 : vector<2x32xf32> to vector<1x2x32xf32>
    %309 = vector.shape_cast %301 : vector<2x32xf32> to vector<1x2x32xf32>
    %310 = vector.shape_cast %302 : vector<2x32xf32> to vector<1x2x32xf32>
    %311 = vector.shape_cast %303 : vector<2x32xf32> to vector<1x2x32xf32>
    %312 = vector.shape_cast %304 : vector<2x32xf32> to vector<1x2x32xf32>
    %313 = vector.shape_cast %305 : vector<2x32xf32> to vector<1x2x32xf32>
    %314 = vector.shape_cast %306 : vector<2x32xf32> to vector<1x2x32xf32>
    %315 = tpu.concatenate %307, %308, %309, %310, %311, %312, %313, %314 in 0 : vector<1x2x32xf32>, vector<1x2x32xf32>, vector<1x2x32xf32>, vector<1x2x32xf32>, vector<1x2x32xf32>, vector<1x2x32xf32>, vector<1x2x32xf32>, vector<1x2x32xf32> -> vector<8x2x32xf32>
    %316 = vector.extract_strided_slice %298 {offsets = [2, 0], sizes = [2, 32], strides = [1, 1]} : vector<4x32xf32> to vector<2x32xf32>
    %317 = vector.extract_strided_slice %262 {offsets = [2, 0], sizes = [2, 32], strides = [1, 1]} : vector<4x32xf32> to vector<2x32xf32>
    %318 = vector.extract_strided_slice %226 {offsets = [2, 0], sizes = [2, 32], strides = [1, 1]} : vector<4x32xf32> to vector<2x32xf32>
    %319 = vector.extract_strided_slice %190 {offsets = [2, 0], sizes = [2, 32], strides = [1, 1]} : vector<4x32xf32> to vector<2x32xf32>
    %320 = vector.extract_strided_slice %154 {offsets = [2, 0], sizes = [2, 32], strides = [1, 1]} : vector<4x32xf32> to vector<2x32xf32>
    %321 = vector.extract_strided_slice %118 {offsets = [2, 0], sizes = [2, 32], strides = [1, 1]} : vector<4x32xf32> to vector<2x32xf32>
    %322 = vector.extract_strided_slice %82 {offsets = [2, 0], sizes = [2, 32], strides = [1, 1]} : vector<4x32xf32> to vector<2x32xf32>
    %323 = vector.extract_strided_slice %46 {offsets = [2, 0], sizes = [2, 32], strides = [1, 1]} : vector<4x32xf32> to vector<2x32xf32>
    %324 = vector.shape_cast %316 : vector<2x32xf32> to vector<1x2x32xf32>
    %325 = vector.shape_cast %317 : vector<2x32xf32> to vector<1x2x32xf32>
    %326 = vector.shape_cast %318 : vector<2x32xf32> to vector<1x2x32xf32>
    %327 = vector.shape_cast %319 : vector<2x32xf32> to vector<1x2x32xf32>
    %328 = vector.shape_cast %320 : vector<2x32xf32> to vector<1x2x32xf32>
    %329 = vector.shape_cast %321 : vector<2x32xf32> to vector<1x2x32xf32>
    %330 = vector.shape_cast %322 : vector<2x32xf32> to vector<1x2x32xf32>
    %331 = vector.shape_cast %323 : vector<2x32xf32> to vector<1x2x32xf32>
    %332 = tpu.concatenate %324, %325, %326, %327, %328, %329, %330, %331 in 0 : vector<1x2x32xf32>, vector<1x2x32xf32>, vector<1x2x32xf32>, vector<1x2x32xf32>, vector<1x2x32xf32>, vector<1x2x32xf32>, vector<1x2x32xf32>, vector<1x2x32xf32> -> vector<8x2x32xf32>
    %333 = tpu.concatenate %315, %332 in 2 : vector<8x2x32xf32>, vector<8x2x32xf32> -> vector<8x2x64xf32>
    %c0_43 = arith.constant 0 : index
    %c0_44 = arith.constant 0 : index
    %c0_45 = arith.constant 0 : index
    %334 = vector.load %arg7[%c0_43, %c0_44, %c0_45] : memref<8x2x64xf32, #tpu.memory_space<vmem>>, vector<8x2x64xf32>
    tpu.vector_store %arg7[%c0_43, %c0_44, %c0_45], %333 {strides = array<i32>} : memref<8x2x64xf32, #tpu.memory_space<vmem>>, vector<8x2x64xf32>,
    %335 = vector.extract_strided_slice %298 {offsets = [0, 0], sizes = [2, 32], strides = [1, 1]} : vector<4x32xf32> to vector<2x32xf32>
    %336 = vector.extract_strided_slice %298 {offsets = [2, 0], sizes = [2, 32], strides = [1, 1]} : vector<4x32xf32> to vector<2x32xf32>
    %337 = tpu.concatenate %335, %336 in 1 : vector<2x32xf32>, vector<2x32xf32> -> vector<2x64xf32>
    %c0_46 = arith.constant 0 : index
    %c0_47 = arith.constant 0 : index
    %338 = vector.load %arg5[%c0_46, %c0_47] : memref<64x32xf32, #tpu.memory_space<vmem>>, vector<64x32xf32>
    %cst_48 = arith.constant dense<0.000000e+00> : vector<2x32xf32>
    %339 = tpu.matmul %337, %338, %cst_48 {dimension_numbers = #tpu.dot_dimension_numbers<[1], [0], [0], [1], [0, 0, 1, 1], [], []>} : vector<2x64xf32>, vector<64x32xf32>, vector<2x32xf32> -> vector<2x32xf32>
    %c0_49 = arith.constant 0 : index
    %c0_50 = arith.constant 0 : index
    %340 = vector.load %arg6[%c0_49, %c0_50] : memref<1x32xf32, #tpu.memory_space<vmem>>, vector<1x32xf32>
    %341 = vector.broadcast %340 : vector<1x32xf32> to vector<2x32xf32>
    %342 = arith.addf %339, %341 : vector<2x32xf32>
    %343 = vector.shape_cast %342 : vector<2x32xf32> to vector<1x2x32xf32>
    %c0_51 = arith.constant 0 : index
    %c0_52 = arith.constant 0 : index
    %c0_53 = arith.constant 0 : index
    %344 = vector.load %arg8[%c0_51, %c0_52, %c0_53] : memref<1x2x32xf32, #tpu.memory_space<vmem>>, vector<1x2x32xf32>
    tpu.vector_store %arg8[%c0_51, %c0_52, %c0_53], %343 {strides = array<i32>} : memref<1x2x32xf32, #tpu.memory_space<vmem>>, vector<1x2x32xf32>,
    return
  }
}

</mosaic_0001>

<llo_original>
// kernel: encoder_forward.1
$region0: #{encoder_forward.1}
  #allocation0 [shape = 'u32[]', space=smem, size = 0x4, offset = 0x4, fixed_abs, tag = 'smem constant byte address 0x4 - core index']
  #allocation1 [shape = 'u32[144,128]{1,0:T(1,128)}', space=vmem, size = 0x12000, scoped, tag = 'internal scratch']
  %s0 = inlined_call_operand.vmem [shape: f32[8,2,16], index: 0, kind: input, shape index: {}]
  %s1 = inlined_call_operand.vmem [shape: f32[16,192], index: 1, kind: input, shape index: {}]
  %s2 = inlined_call_operand.vmem [shape: f32[1,192], index: 2, kind: input, shape index: {}]
  %s3 = inlined_call_operand.vmem [shape: f32[32,192], index: 3, kind: input, shape index: {}]
  %s4 = inlined_call_operand.vmem [shape: f32[4,32], index: 4, kind: input, shape index: {}]
  %s5 = inlined_call_operand.vmem [shape: f32[64,32], index: 5, kind: input, shape index: {}]
  %s6 = inlined_call_operand.vmem [shape: f32[1,32], index: 6, kind: input, shape index: {}]
  %s7 = inlined_call_operand.vmem [shape: f32[8,2,64], index: 7, kind: output, shape index: {0}]
  %s8 = inlined_call_operand.hbm [shape: f32[1,2,32], index: 8, kind: output, shape index: {1}]
  %9 = xla_tuple %s7, %s8
  %s10 = sld [smem:[#allocation0]]
  $region46: #{encoder_forward.1} parent=0
    _
  %s12 = ssub.s32 1, %s10
  %s13 = scalar_select 0, %s12, %s10
  $region1: #{encoder_forward.1} parent=0
    #allocation2 [shape = 'u8[1024]{0}', space=vmem, size = 0x400, scoped, tag = 'output window, operand 1, single buffered']
    #allocation3 [shape = 's32[1]{0}', space=sflag, size = 0x4, scoped, tag = 'scoped memory for encoder_forward.1']
    %14 = vsyncpa [#allocation3], 0
    // Predicated region
    $region2: #{encoder_forward.1} parent=1 // pred_check
      _
    $region3: #{encoder_forward.1} parent=1 // pred_check_branch
      %16 = sbr.rel (0) target = $region5
    $region4: #{encoder_forward.1} parent=1 // pred_region
      _
    $region5: #{encoder_forward.1} parent=1 // pred_fallthru
      _
    // Predicated region
    $region6: #{encoder_forward.1} parent=1 // pred_check
      _
    $region7: #{encoder_forward.1} parent=1 // pred_check_branch
      %18 = sbr.rel (0) target = $region9
    $region8: #{encoder_forward.1} parent=1 // pred_region
      _
    $region9: #{encoder_forward.1} parent=1 // pred_fallthru
      _
    // Predicated region
    $region10: #{encoder_forward.1} parent=1 // pred_check
      _
    $region11: #{encoder_forward.1} parent=1 // pred_check_branch
      %20 = sbr.rel (0) target = $region13
    $region12: #{encoder_forward.1} parent=1 // pred_region
      _
    $region13: #{encoder_forward.1} parent=1 // pred_fallthru
      _
    // Predicated region
    $region14: #{encoder_forward.1} parent=1 // pred_check
      _
    $region15: #{encoder_forward.1} parent=1 // pred_check_branch
      %22 = sbr.rel (0) target = $region17
    $region16: #{encoder_forward.1} parent=1 // pred_region
      _
    $region17: #{encoder_forward.1} parent=1 // pred_fallthru
      _
    // Predicated region
    $region18: #{encoder_forward.1} parent=1 // pred_check
      _
    $region19: #{encoder_forward.1} parent=1 // pred_check_branch
      %24 = sbr.rel (0) target = $region21
    $region20: #{encoder_forward.1} parent=1 // pred_region
      _
    $region21: #{encoder_forward.1} parent=1 // pred_fallthru
      _
    // Predicated region
    $region22: #{encoder_forward.1} parent=1 // pred_check
      _
    $region23: #{encoder_forward.1} parent=1 // pred_check_branch
      %26 = sbr.rel (0) target = $region25
    $region24: #{encoder_forward.1} parent=1 // pred_region
      _
    $region25: #{encoder_forward.1} parent=1 // pred_fallthru
      _
    // Predicated region
    $region26: #{encoder_forward.1} parent=1 // pred_check
      _
    $region27: #{encoder_forward.1} parent=1 // pred_check_branch
      %28 = sbr.rel (0) target = $region29
    $region28: #{encoder_forward.1} parent=1 // pred_region
      _
    $region29: #{encoder_forward.1} parent=1 // pred_fallthru
      _
    %v29 = vld [vmem:[%s0] sm:$0x3]
    %v30 = vld [vmem:[%s0 + $0x2] sm:$0x3]
    %v31 = vld [vmem:[%s0 + $0x4] sm:$0x3]
    %v32 = vld [vmem:[%s0 + $0x6] sm:$0x3]
    %v33 = vld [vmem:[%s0 + $0x8] sm:$0x3]
    %v34 = vld [vmem:[%s0 + $0xa] sm:$0x3]
    %v35 = vld [vmem:[%s0 + $0xc] sm:$0x3]
    %v36 = vld [vmem:[%s0 + $0xe] sm:$0x3]
    %v37 = vld [vmem:[%s1] sm:$0xff]
    %v38 = vld [vmem:[%s1 + $0x8] sm:$0xff]
    %v39 = vld [vmem:[%s1 + $0x10] sm:$0xff]
    %v40 = vld [vmem:[%s1 + $0x18] sm:$0xff]
    %v41 = vld [vmem:[%s2] sm:$0x3]
    %v43 = vlaneseq
    %v44 = vshrl.u32 %v43, 7
    %v45 = vsub.s32 0, %v44
    %v46 = vrot.slane %v41, %v45
    %v47 = vlaneseq
    %v48 = vshrl.u32 %v47, 7
    %v49 = vsub.s32 1, %v48
    %v50 = vrot.slane %v41, %v49
    %v61 = vcombine.low %v29, %v30
    %v62 = vcombine.low %v31, %v32
    %v64 = vunpack.c.l.s4 1983009808
    %v65 = vunpack.c.0.s8 %v64
    %v66 = vlaneseq
    %v67 = vshrl.u32 %v66, 7
    %v68 = vsub.s32 %v65, %v67
    %v69 = vrot.slane %v61, %v68
    %v71 = vunpack.c.l.s4 1983009808
    %v72 = vunpack.c.0.s8 %v71
    %v73 = vlaneseq
    %v74 = vshrl.u32 %v73, 7
    %v75 = vsub.s32 %v72, %v74
    %v76 = vrot.slane %v62, %v75
    %v77 = vcombine.low %v69, %v76
    %v78 = vcombine.low %v33, %v34
    %v79 = vcombine.low %v35, %v36
    %v81 = vunpack.c.l.s4 1983009808
    %v82 = vunpack.c.0.s8 %v81
    %v83 = vlaneseq
    %v84 = vshrl.u32 %v83, 7
    %v85 = vsub.s32 %v82, %v84
    %v86 = vrot.slane %v78, %v85
    %v88 = vunpack.c.l.s4 1983009808
    %v89 = vunpack.c.0.s8 %v88
    %v90 = vlaneseq
    %v91 = vshrl.u32 %v90, 7
    %v92 = vsub.s32 %v89, %v91
    %v93 = vrot.slane %v79, %v92
    %v94 = vcombine.low %v86, %v93
    %vm95 = vcmask 130048
    %v96 = vsel %vm95, %v77, 0
    %v98 = vsel %vm95, %v94, 0
    %100 = vmatprep.subr.mxu0 %v38
    %101 = vmatpush1.msra.mxu0 %v37
    %102 = vmatprep.subr.mxu0 %v40
    %103 = vmatpush1.msra.mxu0 %v39
    %104 = vmatprep.subr.mxu0 0.0
    %105 = vmatpush1.msra.mxu0 0.0
    %106 = vmatprep.subr.mxu0 0.0
    %107 = vmatpush1.msra.mxu0 0.0
    %108 = vmatprep.subr.mxu0 0.0
    %109 = vmatpush1.msra.mxu0 0.0
    %110 = vmatprep.subr.mxu0 0.0
    %111 = vmatpush1.msra.mxu0 0.0
    %112 = vmatprep.subr.mxu0 0.0
    %113 = vmatpush1.msra.mxu0 0.0
    %114 = vmatprep.subr.mxu0 0.0
    %115 = vmatpush1.msra.mxu0 0.0
    %116 = vmatprep.subr.mxu0 0.0
    %117 = vmatpush1.msra.mxu0 0.0
    %118 = vmatprep.subr.mxu0 0.0
    %119 = vmatpush1.msra.mxu0 0.0
    %120 = vmatprep.subr.mxu0 0.0
    %121 = vmatpush1.msra.mxu0 0.0
    %122 = vmatprep.subr.mxu0 0.0
    %123 = vmatpush1.msra.mxu0 0.0
    %124 = vmatprep.subr.mxu0 0.0
    %125 = vmatpush1.msra.mxu0 0.0
    %126 = vmatprep.subr.mxu0 0.0
    %127 = vmatpush1.msra.mxu0 0.0
    %128 = vmatprep.subr.mxu0 0.0
    %129 = vmatpush1.msra.mxu0 0.0
    %130 = vmatprep.subr.mxu0 0.0
    %131 = vmatpush1.msra.mxu0 0.0
    %132 = vmatprep.subr.mxu0 0.0
    %133 = vmatpush1.msra.mxu0 0.0
    %134 = vmatprep.subr.mxu0 0.0
    %135 = vmatpush1.msra.mxu0 0.0
    %136 = vmatprep.subr.mxu0 0.0
    %137 = vmatpush1.msra.mxu0 0.0
    %138 = vmatprep.subr.mxu0 0.0
    %139 = vmatpush1.msra.mxu0 0.0
    %140 = vmatprep.subr.mxu0 0.0
    %141 = vmatpush1.msra.mxu0 0.0
    %142 = vmatprep.subr.mxu0 0.0
    %143 = vmatpush1.msra.mxu0 0.0
    %144 = vmatprep.subr.mxu0 0.0
    %145 = vmatpush1.msra.mxu0 0.0
    %146 = vmatprep.subr.mxu0 0.0
    %147 = vmatpush1.msra.mxu0 0.0
    %148 = vmatprep.subr.mxu0 0.0
    %149 = vmatpush1.msra.mxu0 0.0
    %150 = vmatprep.subr.mxu0 0.0
    %151 = vmatpush1.msra.mxu0 0.0
    %152 = vmatprep.subr.mxu0 0.0
    %153 = vmatpush1.msra.mxu0 0.0
    %154 = vmatprep.subr.mxu0 0.0
    %155 = vmatpush1.msra.mxu0 0.0
    %156 = vmatprep.subr.mxu0 0.0
    %157 = vmatpush1.msra.mxu0 0.0
    %158 = vmatprep.subr.mxu0 0.0
    %159 = vmatpush1.msra.mxu0 0.0
    %160 = vmatprep.subr.mxu0 0.0
    %161 = vmatpush1.msra.mxu0 0.0
    %162 = vmatprep.subr.mxu0 0.0
    %163 = vmatpush1.msra.mxu0 0.0
    %164 = vmatprep.mubr.f32.mxu0 0.0
    %165 = vmatmul.mubr.f32.gmra.mrb[0].mxu0 %v96
    %v166 = vpop.f32.mrb[0].mxu0
    %v167 = vadd.f32 %v46, %v166
    %v168 = vpop.f32.mrb[0].mxu0
    %v169 = vadd.f32 %v50, %v168
    %170 = vmatprep.mubr.f32.mxu0 0.0
    %171 = vmatmul.mubr.f32.gmra.mrb[0].mxu0 %v98
    %v172 = vpop.f32.mrb[0].mxu0
    %v173 = vadd.f32 %v46, %v172
    %v174 = vpop.f32.mrb[0].mxu0
    %v175 = vadd.f32 %v50, %v174
    %176 = vdwg.mxu0
    %v181 = vcombine.low %v167, %v169
    %v182 = vcombine.high %v167, %v169
    %v184 = vunpack.c.l.s4 1983009808
    %v185 = vunpack.c.0.s8 %v184
    %v186 = vlaneseq
    %v187 = vshrl.u32 %v186, 7
    %v188 = vsub.s32 %v185, %v187
    %v189 = vrot.slane %v181, %v188
    %v191 = vunpack.c.l.s4 1983009808
    %v192 = vunpack.c.0.s8 %v191
    %v193 = vlaneseq
    %v194 = vshrl.u32 %v193, 7
    %v195 = vsub.s32 %v192, %v194
    %v196 = vrot.slane %v182, %v195
    %v197 = vcombine.high %v189, %v189
    %v198 = vcombine.high %v196, %v196
    %v199 = vcombine.low %v173, %v175
    %v200 = vcombine.high %v173, %v175
    %v202 = vunpack.c.l.s4 1983009808
    %v203 = vunpack.c.0.s8 %v202
    %v204 = vlaneseq
    %v205 = vshrl.u32 %v204, 7
    %v206 = vsub.s32 %v203, %v205
    %v207 = vrot.slane %v199, %v206
    %v209 = vunpack.c.l.s4 1983009808
    %v210 = vunpack.c.0.s8 %v209
    %v211 = vlaneseq
    %v212 = vshrl.u32 %v211, 7
    %v213 = vsub.s32 %v210, %v212
    %v214 = vrot.slane %v200, %v213
    %v215 = vcombine.high %v207, %v207
    %v216 = vcombine.high %v214, %v214
    %v225 = vld [vmem:[%s3] sm:$0xff]
    %v226 = vld [vmem:[%s3 + $0x8] sm:$0xff]
    %v227 = vld [vmem:[%s3 + $0x10] sm:$0xff]
    %v228 = vld [vmem:[%s3 + $0x18] sm:$0xff]
    %v229 = vld [vmem:[%s3 + $0x20] sm:$0xff]
    %v230 = vld [vmem:[%s3 + $0x28] sm:$0xff]
    %v231 = vld [vmem:[%s3 + $0x30] sm:$0xff]
    %v232 = vld [vmem:[%s3 + $0x38] sm:$0xff]
    %v233 = vld [vmem:[%s4] sm:$0xf]
    %v234 = vcombine.low %v216, %v216
    %v236 = vunpack.c.l.s4 1983009808
    %v237 = vunpack.c.0.s8 %v236
    %v238 = vlaneseq
    %v239 = vshrl.u32 %v238, 7
    %v240 = vsub.s32 %v237, %v239
    %v241 = vrot.slane %v234, %v240
    %v242 = vcombine.high %v241, %v241
    %243 = vrot.lane.b32.xlu0 %v241, 32
    %v244 = vpop.permute.xlu0 %243
    %245 = vrot.lane.b32.xlu0 %v242, 32
    %v246 = vpop.permute.xlu0 %245
    %vm247 = vcmask 261120
    %v248 = vsel %vm247, %v244, %v246
    %vm250 = vcmask 1041408
    %v251 = vsel %vm250, %v189, %v248
    %v253 = vsel %vm247, 0.0, 0
    %255 = vmatprep.subr.mxu0 %v226
    %256 = vmatpush1.msra.mxu0 %v225
    %257 = vmatprep.subr.mxu0 %v228
    %258 = vmatpush1.msra.mxu0 %v227
    %259 = vmatprep.subr.mxu0 %v230
    %260 = vmatpush1.msra.mxu0 %v229
    %261 = vmatprep.subr.mxu0 %v232
    %262 = vmatpush1.msra.mxu0 %v231
    %263 = vmatprep.subr.mxu0 0.0
    %264 = vmatpush1.msra.mxu0 0.0
    %265 = vmatprep.subr.mxu0 0.0
    %266 = vmatpush1.msra.mxu0 0.0
    %267 = vmatprep.subr.mxu0 0.0
    %268 = vmatpush1.msra.mxu0 0.0
    %269 = vmatprep.subr.mxu0 0.0
    %270 = vmatpush1.msra.mxu0 0.0
    %271 = vmatprep.subr.mxu0 0.0
    %272 = vmatpush1.msra.mxu0 0.0
    %273 = vmatprep.subr.mxu0 0.0
    %274 = vmatpush1.msra.mxu0 0.0
    %275 = vmatprep.subr.mxu0 0.0
    %276 = vmatpush1.msra.mxu0 0.0
    %277 = vmatprep.subr.mxu0 0.0
    %278 = vmatpush1.msra.mxu0 0.0
    %279 = vmatprep.subr.mxu0 0.0
    %280 = vmatpush1.msra.mxu0 0.0
    %281 = vmatprep.subr.mxu0 0.0
    %282 = vmatpush1.msra.mxu0 0.0
    %283 = vmatprep.subr.mxu0 0.0
    %284 = vmatpush1.msra.mxu0 0.0
    %285 = vmatprep.subr.mxu0 0.0
    %286 = vmatpush1.msra.mxu0 0.0
    %287 = vmatprep.subr.mxu0 0.0
    %288 = vmatpush1.msra.mxu0 0.0
    %289 = vmatprep.subr.mxu0 0.0
    %290 = vmatpush1.msra.mxu0 0.0
    %291 = vmatprep.subr.mxu0 0.0
    %292 = vmatpush1.msra.mxu0 0.0
    %293 = vmatprep.subr.mxu0 0.0
    %294 = vmatpush1.msra.mxu0 0.0
    %295 = vmatprep.subr.mxu0 0.0
    %296 = vmatpush1.msra.mxu0 0.0
    %297 = vmatprep.subr.mxu0 0.0
    %298 = vmatpush1.msra.mxu0 0.0
    %299 = vmatprep.subr.mxu0 0.0
    %300 = vmatpush1.msra.mxu0 0.0
    %301 = vmatprep.subr.mxu0 0.0
    %302 = vmatpush1.msra.mxu0 0.0
    %303 = vmatprep.subr.mxu0 0.0
    %304 = vmatpush1.msra.mxu0 0.0
    %305 = vmatprep.subr.mxu0 0.0
    %306 = vmatpush1.msra.mxu0 0.0
    %307 = vmatprep.subr.mxu0 0.0
    %308 = vmatpush1.msra.mxu0 0.0
    %309 = vmatprep.subr.mxu0 0.0
    %310 = vmatpush1.msra.mxu0 0.0
    %311 = vmatprep.subr.mxu0 0.0
    %312 = vmatpush1.msra.mxu0 0.0
    %313 = vmatprep.subr.mxu0 0.0
    %314 = vmatpush1.msra.mxu0 0.0
    %315 = vmatprep.subr.mxu0 0.0
    %316 = vmatpush1.msra.mxu0 0.0
    %317 = vmatprep.subr.mxu0 0.0
    %318 = vmatpush1.msra.mxu0 0.0
    %319 = vmatprep.mubr.f32.mxu0 0.0
    %320 = vmatmul.mubr.f32.gmra.mrb[0].mxu0 %v253
    %v321 = vpop.f32.mrb[0].mxu0
    %v322 = vadd.f32 0.0, %v321
    %v323 = vpop.f32.mrb[0].mxu0
    %v324 = vadd.f32 0.0, %v323
    %325 = vdwg.mxu0
    %328 = vrot.lane.b32.xlu0 %v322, 32
    %v329 = vpop.permute.xlu0 %328
    %330 = vrot.lane.b32.xlu0 %v324, 32
    %v331 = vpop.permute.xlu0 %330
    %v332 = vsel %vm247, %v329, %v331
    %v334 = vsel %vm250, %v322, %v332
    %v335 = vadd.f32 %v251, %v334
    %v336 = vxor.u32 %v335, 2147483648
    %v337 = vmul.f32 %v336, 1.442695
    %v338 = vpow.pop %v337
    %v339 = vadd.f32 %v338, 1.0
    %v340 = vrcp.pop %v339
    %v341 = vmul.f32 1.0, %v340
    %343 = vrot.lane.b32.xlu0 %v233, 64
    %v344 = vpop.permute.xlu0 %343
    %v346 = vadd.f32 %v334, %v344
    %348 = vrot.lane.b32.xlu0 %v346, 64
    %v349 = vpop.permute.xlu0 %348
    %v351 = vmul.f32 %v341, %v349
    %353 = vrot.lane.b32.xlu0 %v351, 64
    %v354 = vpop.permute.xlu0 %353
    %v356 = vadd.f32 %v251, %v354
    %v357 = vtanh.pop %v356
    %v358 = vsub.f32 1.0, %v341
    %360 = vrot.lane.b32.xlu0 %v357, 96
    %v361 = vpop.permute.xlu0 %360
    %v363 = vmul.f32 %v358, %v361
    %v364 = vmul.f32 %v341, 0.0
    %v365 = vadd.f32 %v363, %v364
    %v366 = vcombine.low %v214, %v214
    %v368 = vunpack.c.l.s4 1983009808
    %v369 = vunpack.c.0.s8 %v368
    %v370 = vlaneseq
    %v371 = vshrl.u32 %v370, 7
    %v372 = vsub.s32 %v369, %v371
    %v373 = vrot.slane %v366, %v372
    %v374 = vcombine.high %v373, %v373
    %375 = vrot.lane.b32.xlu0 %v373, 32
    %v376 = vpop.permute.xlu0 %375
    %377 = vrot.lane.b32.xlu0 %v374, 32
    %v378 = vpop.permute.xlu0 %377
    %v379 = vsel %vm247, %v376, %v378
    %v381 = vsel %vm250, %v197, %v379
    %383 = vrot.lane.b32.xlu0 %v365, 96
    %v384 = vpop.permute.xlu0 %383
    %v385 = vsel %vm247, %v384, 0
    %387 = vmatprep.subr.mxu0 %v226
    %388 = vmatpush1.msra.mxu0 %v225
    %389 = vmatprep.subr.mxu0 %v228
    %390 = vmatpush1.msra.mxu0 %v227
    %391 = vmatprep.subr.mxu0 %v230
    %392 = vmatpush1.msra.mxu0 %v229
    %393 = vmatprep.subr.mxu0 %v232
    %394 = vmatpush1.msra.mxu0 %v231
    %395 = vmatprep.subr.mxu0 0.0
    %396 = vmatpush1.msra.mxu0 0.0
    %397 = vmatprep.subr.mxu0 0.0
    %398 = vmatpush1.msra.mxu0 0.0
    %399 = vmatprep.subr.mxu0 0.0
    %400 = vmatpush1.msra.mxu0 0.0
    %401 = vmatprep.subr.mxu0 0.0
    %402 = vmatpush1.msra.mxu0 0.0
    %403 = vmatprep.subr.mxu0 0.0
    %404 = vmatpush1.msra.mxu0 0.0
    %405 = vmatprep.subr.mxu0 0.0
    %406 = vmatpush1.msra.mxu0 0.0
    %407 = vmatprep.subr.mxu0 0.0
    %408 = vmatpush1.msra.mxu0 0.0
    %409 = vmatprep.subr.mxu0 0.0
    %410 = vmatpush1.msra.mxu0 0.0
    %411 = vmatprep.subr.mxu0 0.0
    %412 = vmatpush1.msra.mxu0 0.0
    %413 = vmatprep.subr.mxu0 0.0
    %414 = vmatpush1.msra.mxu0 0.0
    %415 = vmatprep.subr.mxu0 0.0
    %416 = vmatpush1.msra.mxu0 0.0
    %417 = vmatprep.subr.mxu0 0.0
    %418 = vmatpush1.msra.mxu0 0.0
    %419 = vmatprep.subr.mxu0 0.0
    %420 = vmatpush1.msra.mxu0 0.0
    %421 = vmatprep.subr.mxu0 0.0
    %422 = vmatpush1.msra.mxu0 0.0
    %423 = vmatprep.subr.mxu0 0.0
    %424 = vmatpush1.msra.mxu0 0.0
    %425 = vmatprep.subr.mxu0 0.0
    %426 = vmatpush1.msra.mxu0 0.0
    %427 = vmatprep.subr.mxu0 0.0
    %428 = vmatpush1.msra.mxu0 0.0
    %429 = vmatprep.subr.mxu0 0.0
    %430 = vmatpush1.msra.mxu0 0.0
    %431 = vmatprep.subr.mxu0 0.0
    %432 = vmatpush1.msra.mxu0 0.0
    %433 = vmatprep.subr.mxu0 0.0
    %434 = vmatpush1.msra.mxu0 0.0
    %435 = vmatprep.subr.mxu0 0.0
    %436 = vmatpush1.msra.mxu0 0.0
    %437 = vmatprep.subr.mxu0 0.0
    %438 = vmatpush1.msra.mxu0 0.0
    %439 = vmatprep.subr.mxu0 0.0
    %440 = vmatpush1.msra.mxu0 0.0
    %441 = vmatprep.subr.mxu0 0.0
    %442 = vmatpush1.msra.mxu0 0.0
    %443 = vmatprep.subr.mxu0 0.0
    %444 = vmatpush1.msra.mxu0 0.0
    %445 = vmatprep.subr.mxu0 0.0
    %446 = vmatpush1.msra.mxu0 0.0
    %447 = vmatprep.subr.mxu0 0.0
    %448 = vmatpush1.msra.mxu0 0.0
    %449 = vmatprep.subr.mxu0 0.0
    %450 = vmatpush1.msra.mxu0 0.0
    %451 = vmatprep.mubr.f32.mxu0 0.0
    %452 = vmatmul.mubr.f32.gmra.mrb[0].mxu0 %v385
    %v453 = vpop.f32.mrb[0].mxu0
    %v454 = vadd.f32 0.0, %v453
    %v455 = vpop.f32.mrb[0].mxu0
    %v456 = vadd.f32 0.0, %v455
    %457 = vdwg.mxu0
    %460 = vrot.lane.b32.xlu0 %v454, 32
    %v461 = vpop.permute.xlu0 %460
    %462 = vrot.lane.b32.xlu0 %v456, 32
    %v463 = vpop.permute.xlu0 %462
    %v464 = vsel %vm247, %v461, %v463
    %v466 = vsel %vm250, %v454, %v464
    %v467 = vadd.f32 %v381, %v466
    %v468 = vxor.u32 %v467, 2147483648
    %v469 = vmul.f32 %v468, 1.442695
    %v470 = vpow.pop %v469
    %v471 = vadd.f32 %v470, 1.0
    %v472 = vrcp.pop %v471
    %v473 = vmul.f32 1.0, %v472
    %v474 = vadd.f32 %v466, %v344
    %476 = vrot.lane.b32.xlu0 %v474, 64
    %v477 = vpop.permute.xlu0 %476
    %v479 = vmul.f32 %v473, %v477
    %481 = vrot.lane.b32.xlu0 %v479, 64
    %v482 = vpop.permute.xlu0 %481
    %v484 = vadd.f32 %v381, %v482
    %v485 = vtanh.pop %v484
    %v486 = vsub.f32 1.0, %v473
    %488 = vrot.lane.b32.xlu0 %v485, 96
    %v489 = vpop.permute.xlu0 %488
    %v491 = vmul.f32 %v486, %v489
    %v492 = vmul.f32 %v473, %v365
    %v493 = vadd.f32 %v491, %v492
    %v494 = vcombine.low %v215, %v215
    %v496 = vunpack.c.l.s4 1983009808
    %v497 = vunpack.c.0.s8 %v496
    %v498 = vlaneseq
    %v499 = vshrl.u32 %v498, 7
    %v500 = vsub.s32 %v497, %v499
    %v501 = vrot.slane %v494, %v500
    %v502 = vcombine.high %v501, %v501
    %503 = vrot.lane.b32.xlu0 %v501, 32
    %v504 = vpop.permute.xlu0 %503
    %505 = vrot.lane.b32.xlu0 %v502, 32
    %v506 = vpop.permute.xlu0 %505
    %v507 = vsel %vm247, %v504, %v506
    %v509 = vsel %vm250, %v196, %v507
    %511 = vrot.lane.b32.xlu0 %v493, 96
    %v512 = vpop.permute.xlu0 %511
    %v513 = vsel %vm247, %v512, 0
    %515 = vmatprep.subr.mxu0 %v226
    %516 = vmatpush1.msra.mxu0 %v225
    %517 = vmatprep.subr.mxu0 %v228
    %518 = vmatpush1.msra.mxu0 %v227
    %519 = vmatprep.subr.mxu0 %v230
    %520 = vmatpush1.msra.mxu0 %v229
    %521 = vmatprep.subr.mxu0 %v232
    %522 = vmatpush1.msra.mxu0 %v231
    %523 = vmatprep.subr.mxu0 0.0
    %524 = vmatpush1.msra.mxu0 0.0
    %525 = vmatprep.subr.mxu0 0.0
    %526 = vmatpush1.msra.mxu0 0.0
    %527 = vmatprep.subr.mxu0 0.0
    %528 = vmatpush1.msra.mxu0 0.0
    %529 = vmatprep.subr.mxu0 0.0
    %530 = vmatpush1.msra.mxu0 0.0
    %531 = vmatprep.subr.mxu0 0.0
    %532 = vmatpush1.msra.mxu0 0.0
    %533 = vmatprep.subr.mxu0 0.0
    %534 = vmatpush1.msra.mxu0 0.0
    %535 = vmatprep.subr.mxu0 0.0
    %536 = vmatpush1.msra.mxu0 0.0
    %537 = vmatprep.subr.mxu0 0.0
    %538 = vmatpush1.msra.mxu0 0.0
    %539 = vmatprep.subr.mxu0 0.0
    %540 = vmatpush1.msra.mxu0 0.0
    %541 = vmatprep.subr.mxu0 0.0
    %542 = vmatpush1.msra.mxu0 0.0
    %543 = vmatprep.subr.mxu0 0.0
    %544 = vmatpush1.msra.mxu0 0.0
    %545 = vmatprep.subr.mxu0 0.0
    %546 = vmatpush1.msra.mxu0 0.0
    %547 = vmatprep.subr.mxu0 0.0
    %548 = vmatpush1.msra.mxu0 0.0
    %549 = vmatprep.subr.mxu0 0.0
    %550 = vmatpush1.msra.mxu0 0.0
    %551 = vmatprep.subr.mxu0 0.0
    %552 = vmatpush1.msra.mxu0 0.0
    %553 = vmatprep.subr.mxu0 0.0
    %554 = vmatpush1.msra.mxu0 0.0
    %555 = vmatprep.subr.mxu0 0.0
    %556 = vmatpush1.msra.mxu0 0.0
    %557 = vmatprep.subr.mxu0 0.0
    %558 = vmatpush1.msra.mxu0 0.0
    %559 = vmatprep.subr.mxu0 0.0
    %560 = vmatpush1.msra.mxu0 0.0
    %561 = vmatprep.subr.mxu0 0.0
    %562 = vmatpush1.msra.mxu0 0.0
    %563 = vmatprep.subr.mxu0 0.0
    %564 = vmatpush1.msra.mxu0 0.0
    %565 = vmatprep.subr.mxu0 0.0
    %566 = vmatpush1.msra.mxu0 0.0
    %567 = vmatprep.subr.mxu0 0.0
    %568 = vmatpush1.msra.mxu0 0.0
    %569 = vmatprep.subr.mxu0 0.0
    %570 = vmatpush1.msra.mxu0 0.0
    %571 = vmatprep.subr.mxu0 0.0
    %572 = vmatpush1.msra.mxu0 0.0
    %573 = vmatprep.subr.mxu0 0.0
    %574 = vmatpush1.msra.mxu0 0.0
    %575 = vmatprep.subr.mxu0 0.0
    %576 = vmatpush1.msra.mxu0 0.0
    %577 = vmatprep.subr.mxu0 0.0
    %578 = vmatpush1.msra.mxu0 0.0
    %579 = vmatprep.mubr.f32.mxu0 0.0
    %580 = vmatmul.mubr.f32.gmra.mrb[0].mxu0 %v513
    %v581 = vpop.f32.mrb[0].mxu0
    %v582 = vadd.f32 0.0, %v581
    %v583 = vpop.f32.mrb[0].mxu0
    %v584 = vadd.f32 0.0, %v583
    %585 = vdwg.mxu0
    %588 = vrot.lane.b32.xlu0 %v582, 32
    %v589 = vpop.permute.xlu0 %588
    %590 = vrot.lane.b32.xlu0 %v584, 32
    %v591 = vpop.permute.xlu0 %590
    %v592 = vsel %vm247, %v589, %v591
    %v594 = vsel %vm250, %v582, %v592
    %v595 = vadd.f32 %v509, %v594
    %v596 = vxor.u32 %v595, 2147483648
    %v597 = vmul.f32 %v596, 1.442695
    %v598 = vpow.pop %v597
    %v599 = vadd.f32 %v598, 1.0
    %v600 = vrcp.pop %v599
    %v601 = vmul.f32 1.0, %v600
    %v602 = vadd.f32 %v594, %v344
    %604 = vrot.lane.b32.xlu0 %v602, 64
    %v605 = vpop.permute.xlu0 %604
    %v607 = vmul.f32 %v601, %v605
    %609 = vrot.lane.b32.xlu0 %v607, 64
    %v610 = vpop.permute.xlu0 %609
    %v612 = vadd.f32 %v509, %v610
    %v613 = vtanh.pop %v612
    %v614 = vsub.f32 1.0, %v601
    %616 = vrot.lane.b32.xlu0 %v613, 96
    %v617 = vpop.permute.xlu0 %616
    %v619 = vmul.f32 %v614, %v617
    %v620 = vmul.f32 %v601, %v493
    %v621 = vadd.f32 %v619, %v620
    %v622 = vcombine.low %v207, %v207
    %v624 = vunpack.c.l.s4 1983009808
    %v625 = vunpack.c.0.s8 %v624
    %v626 = vlaneseq
    %v627 = vshrl.u32 %v626, 7
    %v628 = vsub.s32 %v625, %v627
    %v629 = vrot.slane %v622, %v628
    %v630 = vcombine.high %v629, %v629
    %631 = vrot.lane.b32.xlu0 %v629, 32
    %v632 = vpop.permute.xlu0 %631
    %633 = vrot.lane.b32.xlu0 %v630, 32
    %v634 = vpop.permute.xlu0 %633
    %v635 = vsel %vm247, %v632, %v634
    %v637 = vsel %vm250, %v198, %v635
    %639 = vrot.lane.b32.xlu0 %v621, 96
    %v640 = vpop.permute.xlu0 %639
    %v641 = vsel %vm247, %v640, 0
    %643 = vmatprep.subr.mxu0 %v226
    %644 = vmatpush1.msra.mxu0 %v225
    %645 = vmatprep.subr.mxu0 %v228
    %646 = vmatpush1.msra.mxu0 %v227
    %647 = vmatprep.subr.mxu0 %v230
    %648 = vmatpush1.msra.mxu0 %v229
    %649 = vmatprep.subr.mxu0 %v232
    %650 = vmatpush1.msra.mxu0 %v231
    %651 = vmatprep.subr.mxu0 0.0
    %652 = vmatpush1.msra.mxu0 0.0
    %653 = vmatprep.subr.mxu0 0.0
    %654 = vmatpush1.msra.mxu0 0.0
    %655 = vmatprep.subr.mxu0 0.0
    %656 = vmatpush1.msra.mxu0 0.0
    %657 = vmatprep.subr.mxu0 0.0
    %658 = vmatpush1.msra.mxu0 0.0
    %659 = vmatprep.subr.mxu0 0.0
    %660 = vmatpush1.msra.mxu0 0.0
    %661 = vmatprep.subr.mxu0 0.0
    %662 = vmatpush1.msra.mxu0 0.0
    %663 = vmatprep.subr.mxu0 0.0
    %664 = vmatpush1.msra.mxu0 0.0
    %665 = vmatprep.subr.mxu0 0.0
    %666 = vmatpush1.msra.mxu0 0.0
    %667 = vmatprep.subr.mxu0 0.0
    %668 = vmatpush1.msra.mxu0 0.0
    %669 = vmatprep.subr.mxu0 0.0
    %670 = vmatpush1.msra.mxu0 0.0
    %671 = vmatprep.subr.mxu0 0.0
    %672 = vmatpush1.msra.mxu0 0.0
    %673 = vmatprep.subr.mxu0 0.0
    %674 = vmatpush1.msra.mxu0 0.0
    %675 = vmatprep.subr.mxu0 0.0
    %676 = vmatpush1.msra.mxu0 0.0
    %677 = vmatprep.subr.mxu0 0.0
    %678 = vmatpush1.msra.mxu0 0.0
    %679 = vmatprep.subr.mxu0 0.0
    %680 = vmatpush1.msra.mxu0 0.0
    %681 = vmatprep.subr.mxu0 0.0
    %682 = vmatpush1.msra.mxu0 0.0
    %683 = vmatprep.subr.mxu0 0.0
    %684 = vmatpush1.msra.mxu0 0.0
    %685 = vmatprep.subr.mxu0 0.0
    %686 = vmatpush1.msra.mxu0 0.0
    %687 = vmatprep.subr.mxu0 0.0
    %688 = vmatpush1.msra.mxu0 0.0
    %689 = vmatprep.subr.mxu0 0.0
    %690 = vmatpush1.msra.mxu0 0.0
    %691 = vmatprep.subr.mxu0 0.0
    %692 = vmatpush1.msra.mxu0 0.0
    %693 = vmatprep.subr.mxu0 0.0
    %694 = vmatpush1.msra.mxu0 0.0
    %695 = vmatprep.subr.mxu0 0.0
    %696 = vmatpush1.msra.mxu0 0.0
    %697 = vmatprep.subr.mxu0 0.0
    %698 = vmatpush1.msra.mxu0 0.0
    %699 = vmatprep.subr.mxu0 0.0
    %700 = vmatpush1.msra.mxu0 0.0
    %701 = vmatprep.subr.mxu0 0.0
    %702 = vmatpush1.msra.mxu0 0.0
    %703 = vmatprep.subr.mxu0 0.0
    %704 = vmatpush1.msra.mxu0 0.0
    %705 = vmatprep.subr.mxu0 0.0
    %706 = vmatpush1.msra.mxu0 0.0
    %707 = vmatprep.mubr.f32.mxu0 0.0
    %708 = vmatmul.mubr.f32.gmra.mrb[0].mxu0 %v641
    %v709 = vpop.f32.mrb[0].mxu0
    %v710 = vadd.f32 0.0, %v709
    %v711 = vpop.f32.mrb[0].mxu0
    %v712 = vadd.f32 0.0, %v711
    %713 = vdwg.mxu0
    %716 = vrot.lane.b32.xlu0 %v710, 32
    %v717 = vpop.permute.xlu0 %716
    %718 = vrot.lane.b32.xlu0 %v712, 32
    %v719 = vpop.permute.xlu0 %718
    %v720 = vsel %vm247, %v717, %v719
    %v722 = vsel %vm250, %v710, %v720
    %v723 = vadd.f32 %v637, %v722
    %v724 = vxor.u32 %v723, 2147483648
    %v725 = vmul.f32 %v724, 1.442695
    %v726 = vpow.pop %v725
    %v727 = vadd.f32 %v726, 1.0
    %v728 = vrcp.pop %v727
    %v729 = vmul.f32 1.0, %v728
    %v730 = vadd.f32 %v722, %v344
    %732 = vrot.lane.b32.xlu0 %v730, 64
    %v733 = vpop.permute.xlu0 %732
    %v735 = vmul.f32 %v729, %v733
    %737 = vrot.lane.b32.xlu0 %v735, 64
    %v738 = vpop.permute.xlu0 %737
    %v740 = vadd.f32 %v637, %v738
    %v741 = vtanh.pop %v740
    %v742 = vsub.f32 1.0, %v729
    %744 = vrot.lane.b32.xlu0 %v741, 96
    %v745 = vpop.permute.xlu0 %744
    %v747 = vmul.f32 %v742, %v745
    %v748 = vmul.f32 %v729, %v621
    %v749 = vadd.f32 %v747, %v748
    %v750 = vcombine.low %v198, %v198
    %v752 = vunpack.c.l.s4 1983009808
    %v753 = vunpack.c.0.s8 %v752
    %v754 = vlaneseq
    %v755 = vshrl.u32 %v754, 7
    %v756 = vsub.s32 %v753, %v755
    %v757 = vrot.slane %v750, %v756
    %v758 = vcombine.high %v757, %v757
    %759 = vrot.lane.b32.xlu0 %v757, 32
    %v760 = vpop.permute.xlu0 %759
    %761 = vrot.lane.b32.xlu0 %v758, 32
    %v762 = vpop.permute.xlu0 %761
    %v763 = vsel %vm247, %v760, %v762
    %v765 = vsel %vm250, %v207, %v763
    %767 = vrot.lane.b32.xlu0 %v749, 96
    %v768 = vpop.permute.xlu0 %767
    %v769 = vsel %vm247, %v768, 0
    %771 = vmatprep.subr.mxu0 %v226
    %772 = vmatpush1.msra.mxu0 %v225
    %773 = vmatprep.subr.mxu0 %v228
    %774 = vmatpush1.msra.mxu0 %v227
    %775 = vmatprep.subr.mxu0 %v230
    %776 = vmatpush1.msra.mxu0 %v229
    %777 = vmatprep.subr.mxu0 %v232
    %778 = vmatpush1.msra.mxu0 %v231
    %779 = vmatprep.subr.mxu0 0.0
    %780 = vmatpush1.msra.mxu0 0.0
    %781 = vmatprep.subr.mxu0 0.0
    %782 = vmatpush1.msra.mxu0 0.0
    %783 = vmatprep.subr.mxu0 0.0
    %784 = vmatpush1.msra.mxu0 0.0
    %785 = vmatprep.subr.mxu0 0.0
    %786 = vmatpush1.msra.mxu0 0.0
    %787 = vmatprep.subr.mxu0 0.0
    %788 = vmatpush1.msra.mxu0 0.0
    %789 = vmatprep.subr.mxu0 0.0
    %790 = vmatpush1.msra.mxu0 0.0
    %791 = vmatprep.subr.mxu0 0.0
    %792 = vmatpush1.msra.mxu0 0.0
    %793 = vmatprep.subr.mxu0 0.0
    %794 = vmatpush1.msra.mxu0 0.0
    %795 = vmatprep.subr.mxu0 0.0
    %796 = vmatpush1.msra.mxu0 0.0
    %797 = vmatprep.subr.mxu0 0.0
    %798 = vmatpush1.msra.mxu0 0.0
    %799 = vmatprep.subr.mxu0 0.0
    %800 = vmatpush1.msra.mxu0 0.0
    %801 = vmatprep.subr.mxu0 0.0
    %802 = vmatpush1.msra.mxu0 0.0
    %803 = vmatprep.subr.mxu0 0.0
    %804 = vmatpush1.msra.mxu0 0.0
    %805 = vmatprep.subr.mxu0 0.0
    %806 = vmatpush1.msra.mxu0 0.0
    %807 = vmatprep.subr.mxu0 0.0
    %808 = vmatpush1.msra.mxu0 0.0
    %809 = vmatprep.subr.mxu0 0.0
    %810 = vmatpush1.msra.mxu0 0.0
    %811 = vmatprep.subr.mxu0 0.0
    %812 = vmatpush1.msra.mxu0 0.0
    %813 = vmatprep.subr.mxu0 0.0
    %814 = vmatpush1.msra.mxu0 0.0
    %815 = vmatprep.subr.mxu0 0.0
    %816 = vmatpush1.msra.mxu0 0.0
    %817 = vmatprep.subr.mxu0 0.0
    %818 = vmatpush1.msra.mxu0 0.0
    %819 = vmatprep.subr.mxu0 0.0
    %820 = vmatpush1.msra.mxu0 0.0
    %821 = vmatprep.subr.mxu0 0.0
    %822 = vmatpush1.msra.mxu0 0.0
    %823 = vmatprep.subr.mxu0 0.0
    %824 = vmatpush1.msra.mxu0 0.0
    %825 = vmatprep.subr.mxu0 0.0
    %826 = vmatpush1.msra.mxu0 0.0
    %827 = vmatprep.subr.mxu0 0.0
    %828 = vmatpush1.msra.mxu0 0.0
    %829 = vmatprep.subr.mxu0 0.0
    %830 = vmatpush1.msra.mxu0 0.0
    %831 = vmatprep.subr.mxu0 0.0
    %832 = vmatpush1.msra.mxu0 0.0
    %833 = vmatprep.subr.mxu0 0.0
    %834 = vmatpush1.msra.mxu0 0.0
    %835 = vmatprep.mubr.f32.mxu0 0.0
    %836 = vmatmul.mubr.f32.gmra.mrb[0].mxu0 %v769
    %v837 = vpop.f32.mrb[0].mxu0
    %v838 = vadd.f32 0.0, %v837
    %v839 = vpop.f32.mrb[0].mxu0
    %v840 = vadd.f32 0.0, %v839
    %841 = vdwg.mxu0
    %844 = vrot.lane.b32.xlu0 %v838, 32
    %v845 = vpop.permute.xlu0 %844
    %846 = vrot.lane.b32.xlu0 %v840, 32
    %v847 = vpop.permute.xlu0 %846
    %v848 = vsel %vm247, %v845, %v847
    %v850 = vsel %vm250, %v838, %v848
    %v851 = vadd.f32 %v765, %v850
    %v852 = vxor.u32 %v851, 2147483648
    %v853 = vmul.f32 %v852, 1.442695
    %v854 = vpow.pop %v853
    %v855 = vadd.f32 %v854, 1.0
    %v856 = vrcp.pop %v855
    %v857 = vmul.f32 1.0, %v856
    %v858 = vadd.f32 %v850, %v344
    %860 = vrot.lane.b32.xlu0 %v858, 64
    %v861 = vpop.permute.xlu0 %860
    %v863 = vmul.f32 %v857, %v861
    %865 = vrot.lane.b32.xlu0 %v863, 64
    %v866 = vpop.permute.xlu0 %865
    %v868 = vadd.f32 %v765, %v866
    %v869 = vtanh.pop %v868
    %v870 = vsub.f32 1.0, %v857
    %872 = vrot.lane.b32.xlu0 %v869, 96
    %v873 = vpop.permute.xlu0 %872
    %v875 = vmul.f32 %v870, %v873
    %v876 = vmul.f32 %v857, %v749
    %v877 = vadd.f32 %v875, %v876
    %v878 = vcombine.low %v196, %v196
    %v880 = vunpack.c.l.s4 1983009808
    %v881 = vunpack.c.0.s8 %v880
    %v882 = vlaneseq
    %v883 = vshrl.u32 %v882, 7
    %v884 = vsub.s32 %v881, %v883
    %v885 = vrot.slane %v878, %v884
    %v886 = vcombine.high %v885, %v885
    %887 = vrot.lane.b32.xlu0 %v885, 32
    %v888 = vpop.permute.xlu0 %887
    %889 = vrot.lane.b32.xlu0 %v886, 32
    %v890 = vpop.permute.xlu0 %889
    %v891 = vsel %vm247, %v888, %v890
    %v893 = vsel %vm250, %v215, %v891
    %895 = vrot.lane.b32.xlu0 %v877, 96
    %v896 = vpop.permute.xlu0 %895
    %v897 = vsel %vm247, %v896, 0
    %899 = vmatprep.subr.mxu0 %v226
    %900 = vmatpush1.msra.mxu0 %v225
    %901 = vmatprep.subr.mxu0 %v228
    %902 = vmatpush1.msra.mxu0 %v227
    %903 = vmatprep.subr.mxu0 %v230
    %904 = vmatpush1.msra.mxu0 %v229
    %905 = vmatprep.subr.mxu0 %v232
    %906 = vmatpush1.msra.mxu0 %v231
    %907 = vmatprep.subr.mxu0 0.0
    %908 = vmatpush1.msra.mxu0 0.0
    %909 = vmatprep.subr.mxu0 0.0
    %910 = vmatpush1.msra.mxu0 0.0
    %911 = vmatprep.subr.mxu0 0.0
    %912 = vmatpush1.msra.mxu0 0.0
    %913 = vmatprep.subr.mxu0 0.0
    %914 = vmatpush1.msra.mxu0 0.0
    %915 = vmatprep.subr.mxu0 0.0
    %916 = vmatpush1.msra.mxu0 0.0
    %917 = vmatprep.subr.mxu0 0.0
    %918 = vmatpush1.msra.mxu0 0.0
    %919 = vmatprep.subr.mxu0 0.0
    %920 = vmatpush1.msra.mxu0 0.0
    %921 = vmatprep.subr.mxu0 0.0
    %922 = vmatpush1.msra.mxu0 0.0
    %923 = vmatprep.subr.mxu0 0.0
    %924 = vmatpush1.msra.mxu0 0.0
    %925 = vmatprep.subr.mxu0 0.0
    %926 = vmatpush1.msra.mxu0 0.0
    %927 = vmatprep.subr.mxu0 0.0
    %928 = vmatpush1.msra.mxu0 0.0
    %929 = vmatprep.subr.mxu0 0.0
    %930 = vmatpush1.msra.mxu0 0.0
    %931 = vmatprep.subr.mxu0 0.0
    %932 = vmatpush1.msra.mxu0 0.0
    %933 = vmatprep.subr.mxu0 0.0
    %934 = vmatpush1.msra.mxu0 0.0
    %935 = vmatprep.subr.mxu0 0.0
    %936 = vmatpush1.msra.mxu0 0.0
    %937 = vmatprep.subr.mxu0 0.0
    %938 = vmatpush1.msra.mxu0 0.0
    %939 = vmatprep.subr.mxu0 0.0
    %940 = vmatpush1.msra.mxu0 0.0
    %941 = vmatprep.subr.mxu0 0.0
    %942 = vmatpush1.msra.mxu0 0.0
    %943 = vmatprep.subr.mxu0 0.0
    %944 = vmatpush1.msra.mxu0 0.0
    %945 = vmatprep.subr.mxu0 0.0
    %946 = vmatpush1.msra.mxu0 0.0
    %947 = vmatprep.subr.mxu0 0.0
    %948 = vmatpush1.msra.mxu0 0.0
    %949 = vmatprep.subr.mxu0 0.0
    %950 = vmatpush1.msra.mxu0 0.0
    %951 = vmatprep.subr.mxu0 0.0
    %952 = vmatpush1.msra.mxu0 0.0
    %953 = vmatprep.subr.mxu0 0.0
    %954 = vmatpush1.msra.mxu0 0.0
    %955 = vmatprep.subr.mxu0 0.0
    %956 = vmatpush1.msra.mxu0 0.0
    %957 = vmatprep.subr.mxu0 0.0
    %958 = vmatpush1.msra.mxu0 0.0
    %959 = vmatprep.subr.mxu0 0.0
    %960 = vmatpush1.msra.mxu0 0.0
    %961 = vmatprep.subr.mxu0 0.0
    %962 = vmatpush1.msra.mxu0 0.0
    %963 = vmatprep.mubr.f32.mxu0 0.0
    %964 = vmatmul.mubr.f32.gmra.mrb[0].mxu0 %v897
    %v965 = vpop.f32.mrb[0].mxu0
    %v966 = vadd.f32 0.0, %v965
    %v967 = vpop.f32.mrb[0].mxu0
    %v968 = vadd.f32 0.0, %v967
    %969 = vdwg.mxu0
    %972 = vrot.lane.b32.xlu0 %v966, 32
    %v973 = vpop.permute.xlu0 %972
    %974 = vrot.lane.b32.xlu0 %v968, 32
    %v975 = vpop.permute.xlu0 %974
    %v976 = vsel %vm247, %v973, %v975
    %v978 = vsel %vm250, %v966, %v976
    %v979 = vadd.f32 %v893, %v978
    %v980 = vxor.u32 %v979, 2147483648
    %v981 = vmul.f32 %v980, 1.442695
    %v982 = vpow.pop %v981
    %v983 = vadd.f32 %v982, 1.0
    %v984 = vrcp.pop %v983
    %v985 = vmul.f32 1.0, %v984
    %v986 = vadd.f32 %v978, %v344
    %988 = vrot.lane.b32.xlu0 %v986, 64
    %v989 = vpop.permute.xlu0 %988
    %v991 = vmul.f32 %v985, %v989
    %993 = vrot.lane.b32.xlu0 %v991, 64
    %v994 = vpop.permute.xlu0 %993
    %v996 = vadd.f32 %v893, %v994
    %v997 = vtanh.pop %v996
    %v998 = vsub.f32 1.0, %v985
    %1000 = vrot.lane.b32.xlu0 %v997, 96
    %v1001 = vpop.permute.xlu0 %1000
    %v1003 = vmul.f32 %v998, %v1001
    %v1004 = vmul.f32 %v985, %v877
    %v1005 = vadd.f32 %v1003, %v1004
    %v1006 = vcombine.low %v197, %v197
    %v1008 = vunpack.c.l.s4 1983009808
    %v1009 = vunpack.c.0.s8 %v1008
    %v1010 = vlaneseq
    %v1011 = vshrl.u32 %v1010, 7
    %v1012 = vsub.s32 %v1009, %v1011
    %v1013 = vrot.slane %v1006, %v1012
    %v1014 = vcombine.high %v1013, %v1013
    %1015 = vrot.lane.b32.xlu0 %v1013, 32
    %v1016 = vpop.permute.xlu0 %1015
    %1017 = vrot.lane.b32.xlu0 %v1014, 32
    %v1018 = vpop.permute.xlu0 %1017
    %v1019 = vsel %vm247, %v1016, %v1018
    %v1021 = vsel %vm250, %v214, %v1019
    %1023 = vrot.lane.b32.xlu0 %v1005, 96
    %v1024 = vpop.permute.xlu0 %1023
    %v1025 = vsel %vm247, %v1024, 0
    %1027 = vmatprep.subr.mxu0 %v226
    %1028 = vmatpush1.msra.mxu0 %v225
    %1029 = vmatprep.subr.mxu0 %v228
    %1030 = vmatpush1.msra.mxu0 %v227
    %1031 = vmatprep.subr.mxu0 %v230
    %1032 = vmatpush1.msra.mxu0 %v229
    %1033 = vmatprep.subr.mxu0 %v232
    %1034 = vmatpush1.msra.mxu0 %v231
    %1035 = vmatprep.subr.mxu0 0.0
    %1036 = vmatpush1.msra.mxu0 0.0
    %1037 = vmatprep.subr.mxu0 0.0
    %1038 = vmatpush1.msra.mxu0 0.0
    %1039 = vmatprep.subr.mxu0 0.0
    %1040 = vmatpush1.msra.mxu0 0.0
    %1041 = vmatprep.subr.mxu0 0.0
    %1042 = vmatpush1.msra.mxu0 0.0
    %1043 = vmatprep.subr.mxu0 0.0
    %1044 = vmatpush1.msra.mxu0 0.0
    %1045 = vmatprep.subr.mxu0 0.0
    %1046 = vmatpush1.msra.mxu0 0.0
    %1047 = vmatprep.subr.mxu0 0.0
    %1048 = vmatpush1.msra.mxu0 0.0
    %1049 = vmatprep.subr.mxu0 0.0
    %1050 = vmatpush1.msra.mxu0 0.0
    %1051 = vmatprep.subr.mxu0 0.0
    %1052 = vmatpush1.msra.mxu0 0.0
    %1053 = vmatprep.subr.mxu0 0.0
    %1054 = vmatpush1.msra.mxu0 0.0
    %1055 = vmatprep.subr.mxu0 0.0
    %1056 = vmatpush1.msra.mxu0 0.0
    %1057 = vmatprep.subr.mxu0 0.0
    %1058 = vmatpush1.msra.mxu0 0.0
    %1059 = vmatprep.subr.mxu0 0.0
    %1060 = vmatpush1.msra.mxu0 0.0
    %1061 = vmatprep.subr.mxu0 0.0
    %1062 = vmatpush1.msra.mxu0 0.0
    %1063 = vmatprep.subr.mxu0 0.0
    %1064 = vmatpush1.msra.mxu0 0.0
    %1065 = vmatprep.subr.mxu0 0.0
    %1066 = vmatpush1.msra.mxu0 0.0
    %1067 = vmatprep.subr.mxu0 0.0
    %1068 = vmatpush1.msra.mxu0 0.0
    %1069 = vmatprep.subr.mxu0 0.0
    %1070 = vmatpush1.msra.mxu0 0.0
    %1071 = vmatprep.subr.mxu0 0.0
    %1072 = vmatpush1.msra.mxu0 0.0
    %1073 = vmatprep.subr.mxu0 0.0
    %1074 = vmatpush1.msra.mxu0 0.0
    %1075 = vmatprep.subr.mxu0 0.0
    %1076 = vmatpush1.msra.mxu0 0.0
    %1077 = vmatprep.subr.mxu0 0.0
    %1078 = vmatpush1.msra.mxu0 0.0
    %1079 = vmatprep.subr.mxu0 0.0
    %1080 = vmatpush1.msra.mxu0 0.0
    %1081 = vmatprep.subr.mxu0 0.0
    %1082 = vmatpush1.msra.mxu0 0.0
    %1083 = vmatprep.subr.mxu0 0.0
    %1084 = vmatpush1.msra.mxu0 0.0
    %1085 = vmatprep.subr.mxu0 0.0
    %1086 = vmatpush1.msra.mxu0 0.0
    %1087 = vmatprep.subr.mxu0 0.0
    %1088 = vmatpush1.msra.mxu0 0.0
    %1089 = vmatprep.subr.mxu0 0.0
    %1090 = vmatpush1.msra.mxu0 0.0
    %1091 = vmatprep.mubr.f32.mxu0 0.0
    %1092 = vmatmul.mubr.f32.gmra.mrb[0].mxu0 %v1025
    %v1093 = vpop.f32.mrb[0].mxu0
    %v1094 = vadd.f32 0.0, %v1093
    %v1095 = vpop.f32.mrb[0].mxu0
    %v1096 = vadd.f32 0.0, %v1095
    %1097 = vdwg.mxu0
    %1100 = vrot.lane.b32.xlu0 %v1094, 32
    %v1101 = vpop.permute.xlu0 %1100
    %1102 = vrot.lane.b32.xlu0 %v1096, 32
    %v1103 = vpop.permute.xlu0 %1102
    %v1104 = vsel %vm247, %v1101, %v1103
    %v1106 = vsel %vm250, %v1094, %v1104
    %v1107 = vadd.f32 %v1021, %v1106
    %v1108 = vxor.u32 %v1107, 2147483648
    %v1109 = vmul.f32 %v1108, 1.442695
    %v1110 = vpow.pop %v1109
    %v1111 = vadd.f32 %v1110, 1.0
    %v1112 = vrcp.pop %v1111
    %v1113 = vmul.f32 1.0, %v1112
    %v1114 = vadd.f32 %v1106, %v344
    %1116 = vrot.lane.b32.xlu0 %v1114, 64
    %v1117 = vpop.permute.xlu0 %1116
    %v1119 = vmul.f32 %v1113, %v1117
    %1121 = vrot.lane.b32.xlu0 %v1119, 64
    %v1122 = vpop.permute.xlu0 %1121
    %v1124 = vadd.f32 %v1021, %v1122
    %v1125 = vtanh.pop %v1124
    %v1126 = vsub.f32 1.0, %v1113
    %1128 = vrot.lane.b32.xlu0 %v1125, 96
    %v1129 = vpop.permute.xlu0 %1128
    %v1131 = vmul.f32 %v1126, %v1129
    %v1132 = vmul.f32 %v1113, %v1005
    %v1133 = vadd.f32 %v1131, %v1132
    %v1134 = vcombine.low %v189, %v189
    %v1136 = vunpack.c.l.s4 1983009808
    %v1137 = vunpack.c.0.s8 %v1136
    %v1138 = vlaneseq
    %v1139 = vshrl.u32 %v1138, 7
    %v1140 = vsub.s32 %v1137, %v1139
    %v1141 = vrot.slane %v1134, %v1140
    %v1142 = vcombine.high %v1141, %v1141
    %1143 = vrot.lane.b32.xlu0 %v1141, 32
    %v1144 = vpop.permute.xlu0 %1143
    %1145 = vrot.lane.b32.xlu0 %v1142, 32
    %v1146 = vpop.permute.xlu0 %1145
    %v1147 = vsel %vm247, %v1144, %v1146
    %v1149 = vsel %vm250, %v216, %v1147
    %1151 = vrot.lane.b32.xlu0 %v1133, 96
    %v1152 = vpop.permute.xlu0 %1151
    %v1153 = vsel %vm247, %v1152, 0
    %1155 = vmatprep.subr.mxu0 %v226
    %1156 = vmatpush1.msra.mxu0 %v225
    %1157 = vmatprep.subr.mxu0 %v228
    %1158 = vmatpush1.msra.mxu0 %v227
    %1159 = vmatprep.subr.mxu0 %v230
    %1160 = vmatpush1.msra.mxu0 %v229
    %1161 = vmatprep.subr.mxu0 %v232
    %1162 = vmatpush1.msra.mxu0 %v231
    %1163 = vmatprep.subr.mxu0 0.0
    %1164 = vmatpush1.msra.mxu0 0.0
    %1165 = vmatprep.subr.mxu0 0.0
    %1166 = vmatpush1.msra.mxu0 0.0
    %1167 = vmatprep.subr.mxu0 0.0
    %1168 = vmatpush1.msra.mxu0 0.0
    %1169 = vmatprep.subr.mxu0 0.0
    %1170 = vmatpush1.msra.mxu0 0.0
    %1171 = vmatprep.subr.mxu0 0.0
    %1172 = vmatpush1.msra.mxu0 0.0
    %1173 = vmatprep.subr.mxu0 0.0
    %1174 = vmatpush1.msra.mxu0 0.0
    %1175 = vmatprep.subr.mxu0 0.0
    %1176 = vmatpush1.msra.mxu0 0.0
    %1177 = vmatprep.subr.mxu0 0.0
    %1178 = vmatpush1.msra.mxu0 0.0
    %1179 = vmatprep.subr.mxu0 0.0
    %1180 = vmatpush1.msra.mxu0 0.0
    %1181 = vmatprep.subr.mxu0 0.0
    %1182 = vmatpush1.msra.mxu0 0.0
    %1183 = vmatprep.subr.mxu0 0.0
    %1184 = vmatpush1.msra.mxu0 0.0
    %1185 = vmatprep.subr.mxu0 0.0
    %1186 = vmatpush1.msra.mxu0 0.0
    %1187 = vmatprep.subr.mxu0 0.0
    %1188 = vmatpush1.msra.mxu0 0.0
    %1189 = vmatprep.subr.mxu0 0.0
    %1190 = vmatpush1.msra.mxu0 0.0
    %1191 = vmatprep.subr.mxu0 0.0
    %1192 = vmatpush1.msra.mxu0 0.0
    %1193 = vmatprep.subr.mxu0 0.0
    %1194 = vmatpush1.msra.mxu0 0.0
    %1195 = vmatprep.subr.mxu0 0.0
    %1196 = vmatpush1.msra.mxu0 0.0
    %1197 = vmatprep.subr.mxu0 0.0
    %1198 = vmatpush1.msra.mxu0 0.0
    %1199 = vmatprep.subr.mxu0 0.0
    %1200 = vmatpush1.msra.mxu0 0.0
    %1201 = vmatprep.subr.mxu0 0.0
    %1202 = vmatpush1.msra.mxu0 0.0
    %1203 = vmatprep.subr.mxu0 0.0
    %1204 = vmatpush1.msra.mxu0 0.0
    %1205 = vmatprep.subr.mxu0 0.0
    %1206 = vmatpush1.msra.mxu0 0.0
    %1207 = vmatprep.subr.mxu0 0.0
    %1208 = vmatpush1.msra.mxu0 0.0
    %1209 = vmatprep.subr.mxu0 0.0
    %1210 = vmatpush1.msra.mxu0 0.0
    %1211 = vmatprep.subr.mxu0 0.0
    %1212 = vmatpush1.msra.mxu0 0.0
    %1213 = vmatprep.subr.mxu0 0.0
    %1214 = vmatpush1.msra.mxu0 0.0
    %1215 = vmatprep.subr.mxu0 0.0
    %1216 = vmatpush1.msra.mxu0 0.0
    %1217 = vmatprep.subr.mxu0 0.0
    %1218 = vmatpush1.msra.mxu0 0.0
    %1219 = vmatprep.mubr.f32.mxu0 0.0
    %1220 = vmatmul.mubr.f32.gmra.mrb[0].mxu0 %v1153
    %v1221 = vpop.f32.mrb[0].mxu0
    %v1222 = vadd.f32 0.0, %v1221
    %v1223 = vpop.f32.mrb[0].mxu0
    %v1224 = vadd.f32 0.0, %v1223
    %1225 = vdwg.mxu0
    %1228 = vrot.lane.b32.xlu0 %v1222, 32
    %v1229 = vpop.permute.xlu0 %1228
    %1230 = vrot.lane.b32.xlu0 %v1224, 32
    %v1231 = vpop.permute.xlu0 %1230
    %v1232 = vsel %vm247, %v1229, %v1231
    %v1234 = vsel %vm250, %v1222, %v1232
    %v1235 = vadd.f32 %v1149, %v1234
    %v1236 = vxor.u32 %v1235, 2147483648
    %v1237 = vmul.f32 %v1236, 1.442695
    %v1238 = vpow.pop %v1237
    %v1239 = vadd.f32 %v1238, 1.0
    %v1240 = vrcp.pop %v1239
    %v1241 = vmul.f32 1.0, %v1240
    %v1242 = vadd.f32 %v1234, %v344
    %1244 = vrot.lane.b32.xlu0 %v1242, 64
    %v1245 = vpop.permute.xlu0 %1244
    %v1247 = vmul.f32 %v1241, %v1245
    %1249 = vrot.lane.b32.xlu0 %v1247, 64
    %v1250 = vpop.permute.xlu0 %1249
    %v1252 = vadd.f32 %v1149, %v1250
    %v1253 = vtanh.pop %v1252
    %v1254 = vsub.f32 1.0, %v1241
    %1256 = vrot.lane.b32.xlu0 %v1253, 96
    %v1257 = vpop.permute.xlu0 %1256
    %v1259 = vmul.f32 %v1254, %v1257
    %v1260 = vmul.f32 %v1241, %v1133
    %v1261 = vadd.f32 %v1259, %v1260
    %1263 = vrot.lane.b32.xlu0 %v1261, 96
    %v1264 = vpop.permute.xlu0 %1263
    %v1273 = vrot.slane %v1261, 2
    %v1274 = vrot.slane %v1133, 2
    %v1275 = vrot.slane %v1005, 2
    %v1276 = vrot.slane %v877, 2
    %v1277 = vrot.slane %v749, 2
    %v1278 = vrot.slane %v621, 2
    %v1279 = vrot.slane %v493, 2
    %v1280 = vrot.slane %v365, 2
    %v1289 = vsel %vm247, %v384, %v1273
    %v1290 = vsel %vm247, %v512, %v1274
    %v1291 = vsel %vm247, %v640, %v1275
    %v1292 = vsel %vm247, %v768, %v1276
    %v1293 = vsel %vm247, %v896, %v1277
    %v1294 = vsel %vm247, %v1024, %v1278
    %v1295 = vsel %vm247, %v1152, %v1279
    %v1296 = vsel %vm247, %v1264, %v1280
    %vm1297 = vcmask 517120
    %1298 = vst.msk [vmem:[%s7] sm:$0x3] %vm1297, %v1289
    %1299 = vst.msk [vmem:[%s7 + $0x2] sm:$0x3] %vm1297, %v1290
    %1300 = vst.msk [vmem:[%s7 + $0x4] sm:$0x3] %vm1297, %v1291
    %1301 = vst.msk [vmem:[%s7 + $0x6] sm:$0x3] %vm1297, %v1292
    %1302 = vst.msk [vmem:[%s7 + $0x8] sm:$0x3] %vm1297, %v1293
    %1303 = vst.msk [vmem:[%s7 + $0xa] sm:$0x3] %vm1297, %v1294
    %1304 = vst.msk [vmem:[%s7 + $0xc] sm:$0x3] %vm1297, %v1295
    %1305 = vst.msk [vmem:[%s7 + $0xe] sm:$0x3] %vm1297, %v1296
    %v1306 = vsel %vm247, %v1264, %v1273
    %v1307 = vld [vmem:[%s5] sm:$0xff]
    %v1308 = vld [vmem:[%s5 + $0x8] sm:$0xff]
    %v1309 = vld [vmem:[%s5 + $0x10] sm:$0xff]
    %v1310 = vld [vmem:[%s5 + $0x18] sm:$0xff]
    %v1311 = vld [vmem:[%s5 + $0x20] sm:$0xff]
    %v1312 = vld [vmem:[%s5 + $0x28] sm:$0xff]
    %v1313 = vld [vmem:[%s5 + $0x30] sm:$0xff]
    %v1314 = vld [vmem:[%s5 + $0x38] sm:$0xff]
    %v1315 = vld [vmem:[%s6] sm:$0x1]
    %v1317 = vlaneseq
    %v1318 = vshrl.u32 %v1317, 7
    %v1319 = vsub.s32 0, %v1318
    %v1320 = vrot.slane %v1315, %v1319
    %vm1322 = vcmask 523264
    %v1324 = vsel %vm1322, %v1306, 0
    %1326 = vmatprep.subr.mxu0 0.0
    %1327 = vmatpush1.msra.mxu0 %v1307
    %1328 = vmatprep.subr.mxu0 0.0
    %1329 = vmatpush1.msra.mxu0 %v1308
    %1330 = vmatprep.subr.mxu0 0.0
    %1331 = vmatpush1.msra.mxu0 %v1309
    %1332 = vmatprep.subr.mxu0 0.0
    %1333 = vmatpush1.msra.mxu0 %v1310
    %1334 = vmatprep.subr.mxu0 0.0
    %1335 = vmatpush1.msra.mxu0 %v1311
    %1336 = vmatprep.subr.mxu0 0.0
    %1337 = vmatpush1.msra.mxu0 %v1312
    %1338 = vmatprep.subr.mxu0 0.0
    %1339 = vmatpush1.msra.mxu0 %v1313
    %1340 = vmatprep.subr.mxu0 0.0
    %1341 = vmatpush1.msra.mxu0 %v1314
    %1342 = vmatprep.subr.mxu0 0.0
    %1343 = vmatpush1.msra.mxu0 0.0
    %1344 = vmatprep.subr.mxu0 0.0
    %1345 = vmatpush1.msra.mxu0 0.0
    %1346 = vmatprep.subr.mxu0 0.0
    %1347 = vmatpush1.msra.mxu0 0.0
    %1348 = vmatprep.subr.mxu0 0.0
    %1349 = vmatpush1.msra.mxu0 0.0
    %1350 = vmatprep.subr.mxu0 0.0
    %1351 = vmatpush1.msra.mxu0 0.0
    %1352 = vmatprep.subr.mxu0 0.0
    %1353 = vmatpush1.msra.mxu0 0.0
    %1354 = vmatprep.subr.mxu0 0.0
    %1355 = vmatpush1.msra.mxu0 0.0
    %1356 = vmatprep.subr.mxu0 0.0
    %1357 = vmatpush1.msra.mxu0 0.0
    %1358 = vmatprep.subr.mxu0 0.0
    %1359 = vmatpush1.msra.mxu0 0.0
    %1360 = vmatprep.subr.mxu0 0.0
    %1361 = vmatpush1.msra.mxu0 0.0
    %1362 = vmatprep.subr.mxu0 0.0
    %1363 = vmatpush1.msra.mxu0 0.0
    %1364 = vmatprep.subr.mxu0 0.0
    %1365 = vmatpush1.msra.mxu0 0.0
    %1366 = vmatprep.subr.mxu0 0.0
    %1367 = vmatpush1.msra.mxu0 0.0
    %1368 = vmatprep.subr.mxu0 0.0
    %1369 = vmatpush1.msra.mxu0 0.0
    %1370 = vmatprep.subr.mxu0 0.0
    %1371 = vmatpush1.msra.mxu0 0.0
    %1372 = vmatprep.subr.mxu0 0.0
    %1373 = vmatpush1.msra.mxu0 0.0
    %1374 = vmatprep.subr.mxu0 0.0
    %1375 = vmatpush1.msra.mxu0 0.0
    %1376 = vmatprep.subr.mxu0 0.0
    %1377 = vmatpush1.msra.mxu0 0.0
    %1378 = vmatprep.subr.mxu0 0.0
    %1379 = vmatpush1.msra.mxu0 0.0
    %1380 = vmatprep.subr.mxu0 0.0
    %1381 = vmatpush1.msra.mxu0 0.0
    %1382 = vmatprep.subr.mxu0 0.0
    %1383 = vmatpush1.msra.mxu0 0.0
    %1384 = vmatprep.subr.mxu0 0.0
    %1385 = vmatpush1.msra.mxu0 0.0
    %1386 = vmatprep.subr.mxu0 0.0
    %1387 = vmatpush1.msra.mxu0 0.0
    %1388 = vmatprep.subr.mxu0 0.0
    %1389 = vmatpush1.msra.mxu0 0.0
    %1390 = vmatprep.mubr.f32.mxu0 0.0
    %1391 = vmatmul.mubr.f32.gmra.mrb[0].mxu0 %v1324
    %v1392 = vpop.f32.mrb[0].mxu0
    %v1393 = vadd.f32 %v1320, %v1392
    %v1394 = vpop.f32.mrb[0].mxu0
    %1395 = vdwg.mxu0
    %vm1396 = vcmask 254976
    %1397 = vst.msk [vmem:[#allocation2] sm:$0x3] %vm1396, %v1393
    // Predicated region
    $region30: #{encoder_forward.1} parent=1 // pred_check
      _
    $region31: #{encoder_forward.1} parent=1 // pred_check_branch
      %1399 = sbr.rel (0) target = $region33
    $region32: #{encoder_forward.1} parent=1 // pred_region
      _
    $region33: #{encoder_forward.1} parent=1 // pred_fallthru
      _
    // Predicated region
    $region34: #{encoder_forward.1} parent=1 // pred_check
      _
    $region35: #{encoder_forward.1} parent=1 // pred_check_branch
      %1401 = sbr.rel (0) target = $region37
    $region36: #{encoder_forward.1} parent=1 // pred_region
      %s1403 = ssub.s32 32, 32
      %1404 = vsyncadd [#allocation3], %s1403
      %s1406 = sshll.u32 [#allocation2], 4
      %s1407 = int_to_ptr.vmem [resolvable:$true] %s1406
      %1409 = dma.vmem_to_hbm [thread:$0]  %s1407, 32, %s8, [#allocation3]
    $region37: #{encoder_forward.1} parent=1 // pred_fallthru
      _
    // Predicated region
    $region38: #{encoder_forward.1} parent=1 // pred_check
      _
    $region39: #{encoder_forward.1} parent=1 // pred_check_branch
      %1411 = sbr.rel (0) target = $region41
    $region40: #{encoder_forward.1} parent=1 // pred_region
      _
    $region41: #{encoder_forward.1} parent=1 // pred_fallthru
      _
    // Predicated region
    $region42: #{encoder_forward.1} parent=1 // pred_check
      _
    $region43: #{encoder_forward.1} parent=1 // pred_check_branch
      %1413 = sbr.rel (0) target = $region45
    $region44: #{encoder_forward.1} parent=1 // pred_region
      %1414 = dma.done [#allocation3], 32
    $region45: #{encoder_forward.1} parent=1 // pred_fallthru
      _
    %1415 = vsyncpa [#allocation3], 1

</llo_original>
